<compile_context>
chip_gen: v7x
topology: tpu7x:2x2x1
jax: 0.10.0
libtpu: 0.0.40
codegen_flags: <defaults>
</compile_context>

<pallas_src>
import functools

import jax
import jax.numpy as jnp
from jax import lax
from jax.experimental import pallas as pl
from jax.experimental.pallas import tpu as pltpu


# Below this batch size the fixed pallas_call / per-step overhead dominates the
# ~12 B/example of useful HBM traffic; let XLA fuse gather+mul+reduce+sigmoid.
_MIN_PALLAS_BATCH = 256
# Scoped VMEM limit requested from the compiler and the budget we size against.
_VMEM_LIMIT_BYTES = 32 * 1024 * 1024
_VMEM_BUDGET_BYTES = 24 * 1024 * 1024


def _round_up(x, m):
    return (x + m - 1) // m * m


def _choose_tile_b(requested_tile_b, batch, num_users, num_items, latent_dim):
    """Largest lane-aligned batch tile whose working set fits the VMEM budget.

    Per batch lane the kernel materializes (all f32): one-hot columns of height
    NU and NI, two embedding columns of height D, plus a handful of words for
    the index / logit / double-buffered IO blocks.  Tables are VMEM-resident
    across all tiles; a 2x factor covers transients and pipelining buffers.
    """
    table_bytes = 4 * (num_users + num_items) * latent_dim
    per_lane_bytes = 4 * (num_users + num_items + 2 * latent_dim + 16)
    avail = _VMEM_BUDGET_BYTES - 2 * table_bytes
    if avail <= 0:
        return 0
    max_tile = (avail // (2 * per_lane_bytes)) // 128 * 128
    tile_b = min(requested_tile_b, max_tile, _round_up(batch, 128))
    return (tile_b // 128) * 128


def wmf_forward_kernel(u_table_ref, i_table_ref, u_idx_ref, i_idx_ref, o_ref):
    """One batch tile: fused gather + dot-product + sigmoid, lane-dense.

    u_table_ref: (D, NUM_USERS) f32, resident in VMEM across all tiles.
    i_table_ref: (D, NUM_ITEMS) f32, resident in VMEM across all tiles.
    u_idx_ref / i_idx_ref: (1, TILE_B) int32 index blocks (batch on lanes).
    o_ref: (1, TILE_B) f32 output block (unmasked, lane-dense store).
    """
    u_idx = u_idx_ref[...]                                    # (1, TB) int32
    i_idx = i_idx_ref[...]                                    # (1, TB) int32
    num_users = u_table_ref.shape[1]
    num_items = i_table_ref.shape[1]
    tb = u_idx.shape[1]

    # Row gather as a one-hot MXU matmul: one_hot[n, b] = (n == idx[b]).
    # With HIGHEST precision this is an exact f32 row selection.
    u_onehot = (lax.broadcasted_iota(jnp.int32, (num_users, tb), 0)
                == u_idx).astype(jnp.float32)                 # (NU, TB)
    i_onehot = (lax.broadcasted_iota(jnp.int32, (num_items, tb), 0)
                == i_idx).astype(jnp.float32)                 # (NI, TB)

    u_emb = jnp.dot(u_table_ref[...], u_onehot,
                    preferred_element_type=jnp.float32,
                    precision=lax.Precision.HIGHEST)          # (D, TB)
    i_emb = jnp.dot(i_table_ref[...], i_onehot,
                    preferred_element_type=jnp.float32,
                    precision=lax.Precision.HIGHEST)          # (D, TB)

    # VPU multiply + sublane (XLU) reduce over the latent dim, EUP sigmoid.
    logits = jnp.sum(u_emb * i_emb, axis=0, keepdims=True)    # (1, TB)
    o_ref[...] = jax.nn.sigmoid(logits)


def wmf_forward_reference(user_table, item_table, user_indices, item_indices):
    """Pure-JAX reference / small-problem fallback (identical math)."""
    u = jnp.take(user_table, user_indices, axis=0).astype(jnp.float32)
    it = jnp.take(item_table, item_indices, axis=0).astype(jnp.float32)
    return jax.nn.sigmoid(jnp.sum(u * it, axis=1))


def wmf_forward(user_table, item_table, user_indices, item_indices, *,
                tile_b=2048):
    """Pallas-backed WMF.forward(user_indices, item_indices) -> (B,) ratings."""
    num_users, latent_dim = user_table.shape
    num_items, _ = item_table.shape
    batch = user_indices.shape[0]

    chosen_tile_b = _choose_tile_b(tile_b, batch, num_users, num_items,
                                   latent_dim)
    if batch < _MIN_PALLAS_BATCH or chosen_tile_b < 128:
        # TODO(synk): for production-sized tables, replace this fallback with a
        # scalar-prefetch driven manual-DMA row gather (tables at
        # memory_space=pl.ANY, double-buffered), instead of pure XLA.
        return wmf_forward_reference(user_table, item_table,
                                     user_indices, item_indices)

    tile_b = chosen_tile_b
    b_pad = _round_up(batch, tile_b)
    num_tiles = b_pad // tile_b

    # Lane-dense operands: latent dim on sublanes, batch on lanes.
    u_table_t = user_table.astype(jnp.float32).T              # (D, NU)
    i_table_t = item_table.astype(jnp.float32).T              # (D, NI)
    pad = b_pad - batch
    u_idx = jnp.pad(user_indices.astype(jnp.int32), (0, pad)).reshape(1, b_pad)
    i_idx = jnp.pad(item_indices.astype(jnp.int32), (0, pad)).reshape(1, b_pad)

    table_bytes = (num_users + num_items) * latent_dim * 4
    cost = pl.CostEstimate(
        flops=2 * latent_dim * (num_users + num_items + 1) * b_pad,
        transcendentals=b_pad,
        bytes_accessed=table_bytes + 3 * b_pad * 4,
    )

    out = pl.pallas_call(
        wmf_forward_kernel,
        out_shape=jax.ShapeDtypeStruct((1, b_pad), jnp.float32),
        grid=(num_tiles,),
        in_specs=[
            # Tables: full-array blocks, constant index -> stay VMEM-resident.
            pl.BlockSpec((latent_dim, num_users), lambda i: (0, 0)),
            pl.BlockSpec((latent_dim, num_items), lambda i: (0, 0)),
            # Index vectors: pipelined (1, TILE_B) blocks along the batch.
            pl.BlockSpec((1, tile_b), lambda i: (0, i)),
            pl.BlockSpec((1, tile_b), lambda i: (0, i)),
        ],
        out_specs=pl.BlockSpec((1, tile_b), lambda i: (0, i)),
        compiler_params=pltpu.CompilerParams(
            dimension_semantics=("parallel",),      # v7x: shard tiles on 2 TCs
            vmem_limit_bytes=_VMEM_LIMIT_BYTES,     # fits v7x 64 MiB physical
        ),
        cost_estimate=cost,
    )(u_table_t, i_table_t, u_idx, i_idx)

    return out[0, :batch]                                      # (B,)


def init_wmf_params(key, num_users, num_items, latent_dim):
    """Deterministic parameter init mirroring the torch module's __init__."""
    k_u, k_i, k_w, k_b = jax.random.split(key, 4)
    # torch.nn.Embedding default init is N(0, 1); module scales by 0.1.
    user_table = jax.random.normal(k_u, (num_users, latent_dim), jnp.float32) * 0.1
    item_table = jax.random.normal(k_i, (num_items, latent_dim), jnp.float32) * 0.1
    # affine_output Linear(latent_dim, 1) is defined in __init__ but unused in
    # forward(); initialized here for completeness only.
    bound = 1.0 / (latent_dim ** 0.5)
    affine_w = jax.random.uniform(k_w, (1, latent_dim), jnp.float32, -bound, bound)
    affine_b = jax.random.uniform(k_b, (1,), jnp.float32, -bound, bound)
    return user_table, item_table, affine_w, affine_b


if __name__ == "__main__":
    # Small config consistent with the module; batch large enough to exercise
    # the tiled Pallas path (multiple pipelined grid steps at tile_b=256).
    num_users, num_items, latent_dim = 16, 24, 32
    batch = 1000

    key = jax.random.PRNGKey(0)
    user_table, item_table, _, _ = init_wmf_params(
        key, num_users, num_items, latent_dim)

    k_ui, k_ii = jax.random.split(jax.random.PRNGKey(1))
    user_indices = jax.random.randint(k_ui, (batch,), 0, num_users, jnp.int32)
    item_indices = jax.random.randint(k_ii, (batch,), 0, num_items, jnp.int32)

    fwd = jax.jit(functools.partial(wmf_forward, tile_b=256))
    rating = fwd(user_table, item_table, user_indices, item_indices)
    rating = jax.block_until_ready(rating)

    # Pure-JAX reference check of the forward semantics.
    ref = wmf_forward_reference(user_table, item_table,
                                user_indices, item_indices)
    assert rating.shape == (batch,)
    assert jnp.allclose(rating, ref, atol=1e-4, rtol=1e-4), (
        float(jnp.max(jnp.abs(rating - ref))))

    print("KERNEL_OK")
</pallas_src>

<mosaic_0001>
module attributes {stable_mosaic.version = 11 : i64} {
  func.func @wmf_forward_kernel(%arg0: i32, %arg1: memref<32x16xf32, #tpu.memory_space<vmem>>, %arg2: memref<32x24xf32, #tpu.memory_space<vmem>>, %arg3: memref<1x256xi32, #tpu.memory_space<vmem>>, %arg4: memref<1x256xi32, #tpu.memory_space<vmem>>, %arg5: memref<1x256xf32, #tpu.memory_space<vmem>>) attributes {dimension_semantics = [#tpu.dimension_semantics<parallel>], iteration_bounds = array<i64: 4>, scalar_prefetch = 0 : i64, scratch_operands = 0 : i64, tpu.core_type = #tpu.core_type<tc>, window_params = [{pipeline_mode = #tpu.pipeline_mode<synchronous>, transform_indices = @transform_0, window_bounds = array<i64: 32, 16>}, {pipeline_mode = #tpu.pipeline_mode<synchronous>, transform_indices = @transform_1, window_bounds = array<i64: 32, 24>}, {transform_indices = @transform_2, window_bounds = array<i64: 1, 256>}, {transform_indices = @transform_3, window_bounds = array<i64: 1, 256>}, {transform_indices = @transform_4, window_bounds = array<i64: 1, 256>}]} {
    %c0 = arith.constant 0 : index
    %c0_0 = arith.constant 0 : index
    %0 = vector.load %arg3[%c0, %c0_0] : memref<1x256xi32, #tpu.memory_space<vmem>>, vector<1x256xi32>
    %c0_1 = arith.constant 0 : index
    %c0_2 = arith.constant 0 : index
    %1 = vector.load %arg4[%c0_1, %c0_2] : memref<1x256xi32, #tpu.memory_space<vmem>>, vector<1x256xi32>
    %2 = tpu.iota {dimensions = array<i32: 0>} : vector<16x256xi32>
    %3 = vector.broadcast %0 : vector<1x256xi32> to vector<16x256xi32>
    %4 = arith.cmpi eq, %2, %3 : vector<16x256xi32>
    %5 = arith.extui %4 : vector<16x256xi1> to vector<16x256xi32>
    %6 = arith.sitofp %5 : vector<16x256xi32> to vector<16x256xf32>
    %7 = tpu.iota {dimensions = array<i32: 0>} : vector<24x256xi32>
    %8 = vector.broadcast %1 : vector<1x256xi32> to vector<24x256xi32>
    %9 = arith.cmpi eq, %7, %8 : vector<24x256xi32>
    %10 = arith.extui %9 : vector<24x256xi1> to vector<24x256xi32>
    %11 = arith.sitofp %10 : vector<24x256xi32> to vector<24x256xf32>
    %c0_3 = arith.constant 0 : index
    %c0_4 = arith.constant 0 : index
    %12 = vector.load %arg1[%c0_3, %c0_4] : memref<32x16xf32, #tpu.memory_space<vmem>>, vector<32x16xf32>
    %cst = arith.constant dense<0.000000e+00> : vector<32x256xf32>
    %13 = tpu.matmul %12, %6, %cst {dimension_numbers = #tpu.dot_dimension_numbers<[1], [0], [0], [1], [0, 0, 1, 1], [], []>, precision = #tpu.contract_precision<fp32>} : vector<32x16xf32>, vector<16x256xf32>, vector<32x256xf32> -> vector<32x256xf32>
    %c0_5 = arith.constant 0 : index
    %c0_6 = arith.constant 0 : index
    %14 = vector.load %arg2[%c0_5, %c0_6] : memref<32x24xf32, #tpu.memory_space<vmem>>, vector<32x24xf32>
    %cst_7 = arith.constant dense<0.000000e+00> : vector<32x256xf32>
    %15 = tpu.matmul %14, %11, %cst_7 {dimension_numbers = #tpu.dot_dimension_numbers<[1], [0], [0], [1], [0, 0, 1, 1], [], []>, precision = #tpu.contract_precision<fp32>} : vector<32x24xf32>, vector<24x256xf32>, vector<32x256xf32> -> vector<32x256xf32>
    %16 = arith.mulf %13, %15 : vector<32x256xf32>
    %cst_8 = arith.constant dense<0.000000e+00> : vector<256xf32>
    %17 = vector.multi_reduction <add>, %16, %cst_8 [0] : vector<32x256xf32> to vector<256xf32>
    %18 = vector.shape_cast %17 : vector<256xf32> to vector<1x256xf32>
    %19 = arith.negf %18 : vector<1x256xf32>
    %20 = math.exp %19 : vector<1x256xf32>
    %cst_9 = arith.constant 1.000000e+00 : f32
    %21 = vector.broadcast %cst_9 : f32 to vector<1x256xf32>
    %22 = arith.addf %21, %20 : vector<1x256xf32>
    %23 = arith.divf %21, %22 : vector<1x256xf32>
    %c0_10 = arith.constant 0 : index
    %c0_11 = arith.constant 0 : index
    %24 = vector.load %arg5[%c0_10, %c0_11] : memref<1x256xf32, #tpu.memory_space<vmem>>, vector<1x256xf32>
    tpu.vector_store %arg5[%c0_10, %c0_11], %23 {strides = array<i32>} : memref<1x256xf32, #tpu.memory_space<vmem>>, vector<1x256xf32>,
    return
  }
  func.func @transform_0(%arg0: i32) -> (i32, i32) {
    %c0_i32 = arith.constant 0 : i32
    %c0_i32_0 = arith.constant 0 : i32
    %c0_i32_1 = arith.constant 0 : i32
    return %c0_i32, %c0_i32_0 : i32, i32
  }
  func.func @transform_1(%arg0: i32) -> (i32, i32) {
    %c0_i32 = arith.constant 0 : i32
    %c0_i32_0 = arith.constant 0 : i32
    %c0_i32_1 = arith.constant 0 : i32
    return %c0_i32, %c0_i32_0 : i32, i32
  }
  func.func @transform_2(%arg0: i32) -> (i32, i32) {
    %c0_i32 = arith.constant 0 : i32
    %c0_i32_0 = arith.constant 0 : i32
    return %c0_i32, %arg0 : i32, i32
  }
  func.func @transform_3(%arg0: i32) -> (i32, i32) {
    %c0_i32 = arith.constant 0 : i32
    %c0_i32_0 = arith.constant 0 : i32
    return %c0_i32, %arg0 : i32, i32
  }
  func.func @transform_4(%arg0: i32) -> (i32, i32) {
    %c0_i32 = arith.constant 0 : i32
    %c0_i32_0 = arith.constant 0 : i32
    return %c0_i32, %arg0 : i32, i32
  }
}

</mosaic_0001>

<llo_original>
// kernel: wmf_forward.1
$region0: #{wmf_forward.1}
  #allocation0 [shape = 'u32[]', space=smem, size = 0x4, offset = 0x4, fixed_abs, tag = 'smem constant byte address 0x4 - core index']
  #allocation1 [shape = 'u32[144,128]{1,0:T(1,128)}', space=vmem, size = 0x12000, scoped, tag = 'internal scratch']
  %s0 = inlined_call_operand.vmem [shape: f32[32,16], index: 0, kind: input, shape index: {}]
  %s1 = inlined_call_operand.vmem [shape: f32[32,24], index: 1, kind: input, shape index: {}]
  %s2 = inlined_call_operand.vmem [shape: s32[1,1024], index: 2, kind: input, shape index: {}]
  %s3 = inlined_call_operand.vmem [shape: s32[1,1024], index: 3, kind: input, shape index: {}]
  %s4 = inlined_call_operand.hbm [shape: f32[1,1024], index: 4, kind: output, shape index: {}]
  %s5 = sld [smem:[#allocation0]]
  $region49: #{wmf_forward.1} parent=0
    _
  %s7 = ssub.s32 1, %s5
  %s8 = scalar_select 0, %s7, %s5
  $region1: #{wmf_forward.1} parent=0
    #allocation2 [shape = 'u8[2048]{0}', space=vmem, size = 0x800, scoped, tag = 'output window, operand 0']
    #allocation3 [shape = 's32[2]{0}', space=sflag, size = 0x8, scoped, tag = 'scoped memory for wmf_forward.1']
    %9 = vsyncpa [#allocation3], 0
    %s10 = scalar_lea.sflag [#allocation3], 1
    %11 = vsyncpa %s10, 0
    loop: start=0, step=1, limit=6
    $region2: #{wmf_forward.1} parent=1 // loop_pre_header
      _
    $region3: #{wmf_forward.1} parent=1 // loop_header
      %s13 = sphi 0, %s17
      %p14 = scmp.ge.s32.totalorder %s13, 6
      %s21 = sphi 0, %s21
      %s23 = sphi 0, %s21
      %s24 = sphi 0, %s23
      %s38 = sphi 0, %s24
      %s42 = sphi 0, %s42
      %s44 = sphi 0, %s42
      %s45 = sphi 0, %s44
      %s59 = sphi 0, %s45
      %s65 = sphi 0, %s67
      %s68 = sphi 0, %s65
      %s69 = sphi 0, %s68
      %s85 = sphi 0, %s69
      %s91 = sphi 0, %s93
      %s94 = sphi 0, %s91
      %s95 = sphi 0, %s94
      %s111 = sphi 0, %s95
      %s117 = sphi 0, %s119
      %s120 = sphi 0, %s117
      %s121 = sphi 0, %s120
      %s137 = sphi 0, %s121
    $region4: #{wmf_forward.1} parent=1 // loop_header_branch
      %16 = sbr.rel (%p14) target = $region8
    $region5: #{wmf_forward.1} parent=1 // loop_body
      %s18 = ssub.s32 %s13, 1
      %s19 = ssub.s32 %s13, 2
      %s20 = sadd.s32 %s13, 1
      %s22 = sadd.s32 %s21, 1
      %p25 = scmp.eq.s32.totalorder %s13, 3
      %p26 = scmp.ne.s32.totalorder %s21, %s23
      %p27 = scmp.eq.s32.totalorder %s13, 0
      %p28 = por %p26, %p27
      %p29 = scmp.ne.s32.totalorder %s21, %s23
      %p30 = scmp.eq.s32.totalorder %s18, 3
      %p31 = por %p29, %p30
      %p32 = scmp.ne.s32.totalorder %s23, %s24
      %p33 = scmp.eq.s32.totalorder %s18, 0
      %p34 = por %p32, %p33
      %p35 = scmp.ne.s32.totalorder %s23, %s24
      %p36 = scmp.eq.s32.totalorder %s19, 3
      %p37 = por %p35, %p36
      %p39 = scmp.ne.s32.totalorder %s24, %s38
      %p40 = scmp.eq.s32.totalorder %s19, 0
      %p41 = por %p39, %p40
      %s43 = sadd.s32 %s42, 1
      %p46 = scmp.eq.s32.totalorder %s13, 3
      %p47 = scmp.ne.s32.totalorder %s42, %s44
      %p48 = scmp.eq.s32.totalorder %s13, 0
      %p49 = por %p47, %p48
      %p50 = scmp.ne.s32.totalorder %s42, %s44
      %p51 = scmp.eq.s32.totalorder %s18, 3
      %p52 = por %p50, %p51
      %p53 = scmp.ne.s32.totalorder %s44, %s45
      %p54 = scmp.eq.s32.totalorder %s18, 0
      %p55 = por %p53, %p54
      %p56 = scmp.ne.s32.totalorder %s44, %s45
      %p57 = scmp.eq.s32.totalorder %s19, 3
      %p58 = por %p56, %p57
      %p60 = scmp.ne.s32.totalorder %s45, %s59
      %p61 = scmp.eq.s32.totalorder %s19, 0
      %p62 = por %p60, %p61
      %s63 = ssub.s32 %s13, %s20
      %p64 = scmp.eq.s32.totalorder %s63, 0
      %s66 = sadd.s32 %s65, 1
      %s67 = scalar_select %p64, %s65, %s66
      %p70 = pneg %p64
      %p71 = scmp.eq.s32.totalorder %s13, 3
      %p72 = por %p70, %p71
      %p73 = scmp.ne.s32.totalorder %s65, %s68
      %p74 = scmp.eq.s32.totalorder %s13, 0
      %p75 = por %p73, %p74
      %p76 = scmp.ne.s32.totalorder %s65, %s68
      %p77 = scmp.eq.s32.totalorder %s18, 3
      %p78 = por %p76, %p77
      %p79 = scmp.ne.s32.totalorder %s68, %s69
      %p80 = scmp.eq.s32.totalorder %s18, 0
      %p81 = por %p79, %p80
      %p82 = scmp.ne.s32.totalorder %s68, %s69
      %p83 = scmp.eq.s32.totalorder %s19, 3
      %p84 = por %p82, %p83
      %p86 = scmp.ne.s32.totalorder %s69, %s85
      %p87 = scmp.eq.s32.totalorder %s19, 0
      %p88 = por %p86, %p87
      %s89 = ssub.s32 %s13, %s20
      %p90 = scmp.eq.s32.totalorder %s89, 0
      %s92 = sadd.s32 %s91, 1
      %s93 = scalar_select %p90, %s91, %s92
      %p96 = pneg %p90
      %p97 = scmp.eq.s32.totalorder %s13, 3
      %p98 = por %p96, %p97
      %p99 = scmp.ne.s32.totalorder %s91, %s94
      %p100 = scmp.eq.s32.totalorder %s13, 0
      %p101 = por %p99, %p100
      %p102 = scmp.ne.s32.totalorder %s91, %s94
      %p103 = scmp.eq.s32.totalorder %s18, 3
      %p104 = por %p102, %p103
      %p105 = scmp.ne.s32.totalorder %s94, %s95
      %p106 = scmp.eq.s32.totalorder %s18, 0
      %p107 = por %p105, %p106
      %p108 = scmp.ne.s32.totalorder %s94, %s95
      %p109 = scmp.eq.s32.totalorder %s19, 3
      %p110 = por %p108, %p109
      %p112 = scmp.ne.s32.totalorder %s95, %s111
      %p113 = scmp.eq.s32.totalorder %s19, 0
      %p114 = por %p112, %p113
      %s115 = ssub.s32 %s13, %s20
      %p116 = scmp.eq.s32.totalorder %s115, 0
      %s118 = sadd.s32 %s117, 1
      %s119 = scalar_select %p116, %s117, %s118
      %p122 = pneg %p116
      %p123 = scmp.eq.s32.totalorder %s13, 3
      %p124 = por %p122, %p123
      %p125 = scmp.ne.s32.totalorder %s117, %s120
      %p126 = scmp.eq.s32.totalorder %s13, 0
      %p127 = por %p125, %p126
      %p128 = scmp.ne.s32.totalorder %s117, %s120
      %p129 = scmp.eq.s32.totalorder %s18, 3
      %p130 = por %p128, %p129
      %p131 = scmp.ne.s32.totalorder %s120, %s121
      %p132 = scmp.eq.s32.totalorder %s18, 0
      %p133 = por %p131, %p132
      %p134 = scmp.ne.s32.totalorder %s120, %s121
      %p135 = scmp.eq.s32.totalorder %s19, 3
      %p136 = por %p134, %p135
      %p138 = scmp.ne.s32.totalorder %s121, %s137
      %p139 = scmp.eq.s32.totalorder %s19, 0
      %p140 = por %p138, %p139
      %p141 = scmp.le.s32.totalorder 1, %s13
      %p142 = scmp.lt.s32.totalorder %s13, 5
      %p143 = pnand %p141, %p142
      %p144 = pneg %p143
      // Predicated region
      $region9: #{wmf_forward.1} parent=5 // pred_check
        _
      $region10: #{wmf_forward.1} parent=5 // pred_check_branch
        %146 = sbr.rel (%p143) target = $region12
      $region11: #{wmf_forward.1} parent=5 // pred_region
        %s147 = ssub.s32 %s13, 1
        // Predicated region
        $region13: #{wmf_forward.1} parent=11 // pred_check
          %p148 = pneg %p34
        $region14: #{wmf_forward.1} parent=11 // pred_check_branch
          %150 = sbr.rel (%p148) target = $region16
        $region15: #{wmf_forward.1} parent=11 // pred_region
          _
        $region16: #{wmf_forward.1} parent=11 // pred_fallthru
          _
        // Predicated region
        $region17: #{wmf_forward.1} parent=11 // pred_check
          %p151 = pneg %p55
        $region18: #{wmf_forward.1} parent=11 // pred_check_branch
          %153 = sbr.rel (%p151) target = $region20
        $region19: #{wmf_forward.1} parent=11 // pred_region
          _
        $region20: #{wmf_forward.1} parent=11 // pred_fallthru
          _
      $region12: #{wmf_forward.1} parent=5 // pred_fallthru
        _
      %p154 = scmp.lt.s32.totalorder %s13, 4
      // Predicated region
      $region21: #{wmf_forward.1} parent=5 // pred_check
        %p155 = pneg %p154
      $region22: #{wmf_forward.1} parent=5 // pred_check_branch
        %157 = sbr.rel (%p155) target = $region24
      $region23: #{wmf_forward.1} parent=5 // pred_region
        // Predicated region
        $region25: #{wmf_forward.1} parent=23 // pred_check
          %p158 = pneg %p75
        $region26: #{wmf_forward.1} parent=23 // pred_check_branch
          %160 = sbr.rel (%p158) target = $region28
        $region27: #{wmf_forward.1} parent=23 // pred_region
          %s161 = smul.u32 2, %s13
          %p162 = scmp.lt.s32.totalorder %s161, 7
          %s163 = scalar_select %p162, %s161, 7
          %s164 = scalar_lea.vmem %s2, %s163
          %s165 = smul.u32 2, %s13
        $region28: #{wmf_forward.1} parent=23 // pred_fallthru
          _
        // Predicated region
        $region29: #{wmf_forward.1} parent=23 // pred_check
          %p166 = pneg %p101
        $region30: #{wmf_forward.1} parent=23 // pred_check_branch
          %168 = sbr.rel (%p166) target = $region32
        $region31: #{wmf_forward.1} parent=23 // pred_region
          %s169 = smul.u32 2, %s13
          %p170 = scmp.lt.s32.totalorder %s169, 7
          %s171 = scalar_select %p170, %s169, 7
          %s172 = scalar_lea.vmem %s3, %s171
          %s173 = smul.u32 2, %s13
        $region32: #{wmf_forward.1} parent=23 // pred_fallthru
          _
      $region24: #{wmf_forward.1} parent=5 // pred_fallthru
        _
      %p174 = scmp.le.s32.totalorder 1, %s13
      %p175 = scmp.lt.s32.totalorder %s13, 5
      %p176 = pnand %p174, %p175
      %p177 = pneg %p176
      // Predicated region
      $region33: #{wmf_forward.1} parent=5 // pred_check
        _
      $region34: #{wmf_forward.1} parent=5 // pred_check_branch
        %179 = sbr.rel (%p176) target = $region36
      $region35: #{wmf_forward.1} parent=5 // pred_region
        %s180 = ssub.s32 %s13, 1
        %p181 = pneg %p34
        %p182 = pneg %p31
        %p183 = pneg %p55
        %p184 = pneg %p52
        %s185 = smul.u32 2, %s18
        %p186 = scmp.lt.s32.totalorder %s185, 7
        %s187 = scalar_select %p186, %s185, 7
        %s188 = scalar_lea.vmem %s2, %s187
        %p189 = pneg %p81
        %p190 = pneg %p78
        %s191 = smul.u32 2, %s18
        %p192 = scmp.lt.s32.totalorder %s191, 7
        %s193 = scalar_select %p192, %s191, 7
        %s194 = scalar_lea.vmem %s3, %s193
        %p195 = pneg %p107
        %p196 = pneg %p104
        %p197 = pneg %p133
        %p198 = pneg %p130
        %s199 = sand.u32 %s120, 1
        %s200 = scalar_lea.sflag [#allocation3], %s199
        %s201 = sand.u32 %s120, 1
        %s202 = smul.addr %s201, 2
        %s203 = scalar_lea.vmem [#allocation2], %s202
        %s204 = smul.u32 2, %s18
        %p205 = scmp.lt.s32.totalorder %s204, 7
        %s206 = scalar_select %p205, %s204, 7
        %s207 = scalar_lea.vmem %s2, %s206
        %s208 = smul.u32 2, %s18
        %s209 = smul.u32 2, %s18
        %p210 = scmp.lt.s32.totalorder %s209, 7
        %s211 = scalar_select %p210, %s209, 7
        %s212 = scalar_lea.vmem %s3, %s211
        %s213 = smul.u32 2, %s18
        %s214 = smul.u32 2, %s18
        %v215 = vld [vmem:[%s207] sm:$0x3]
        %v216 = vld [vmem:[%s212] sm:$0x3]
        %v217 = vlaneseq
        %v218 = vshrl.u32 %v217, 7
        %v219 = vadd.s32 %v218, 8
        %v220 = vlaneseq
        %v221 = vshrl.u32 %v220, 7
        %v222 = vsub.s32 0, %v221
        %v223 = vrot.slane %v215, %v222
        %v224 = vlaneseq
        %v225 = vshrl.u32 %v224, 7
        %v226 = vsub.s32 1, %v225
        %v227 = vrot.slane %v215, %v226
        %vm228 = vcmp.eq.s32.totalorder %v218, %v223
        %vm229 = vcmp.eq.s32.totalorder %v218, %v227
        %vm230 = vcmp.eq.s32.totalorder %v219, %v223
        %vm231 = vcmp.eq.s32.totalorder %v219, %v227
        %v232 = vsel %vm228, 1, 0
        %v233 = vsel %vm229, 1, 0
        %v234 = vsel %vm230, 1, 0
        %v235 = vsel %vm231, 1, 0
        %v236 = vcvt.s32.f32 %v232
        %v237 = vcvt.s32.f32 %v233
        %v238 = vcvt.s32.f32 %v234
        %v239 = vcvt.s32.f32 %v235
        %v240 = vadd.s32 %v218, 16
        %v241 = vlaneseq
        %v242 = vshrl.u32 %v241, 7
        %v243 = vsub.s32 0, %v242
        %v244 = vrot.slane %v216, %v243
        %v245 = vlaneseq
        %v246 = vshrl.u32 %v245, 7
        %v247 = vsub.s32 1, %v246
        %v248 = vrot.slane %v216, %v247
        %vm249 = vcmp.eq.s32.totalorder %v218, %v244
        %vm250 = vcmp.eq.s32.totalorder %v218, %v248
        %vm251 = vcmp.eq.s32.totalorder %v219, %v244
        %vm252 = vcmp.eq.s32.totalorder %v219, %v248
        %vm253 = vcmp.eq.s32.totalorder %v240, %v244
        %vm254 = vcmp.eq.s32.totalorder %v240, %v248
        %v255 = vsel %vm249, 1, 0
        %v256 = vsel %vm250, 1, 0
        %v257 = vsel %vm251, 1, 0
        %v258 = vsel %vm252, 1, 0
        %v259 = vsel %vm253, 1, 0
        %v260 = vsel %vm254, 1, 0
        %v261 = vcvt.s32.f32 %v255
        %v262 = vcvt.s32.f32 %v256
        %v263 = vcvt.s32.f32 %v257
        %v264 = vcvt.s32.f32 %v258
        %v265 = vcvt.s32.f32 %v259
        %v266 = vcvt.s32.f32 %v260
        %v267 = vld [vmem:[%s0] sm:$0xff]
        %v268 = vld [vmem:[%s0 + $0x8] sm:$0xff]
        %v269 = vld [vmem:[%s0 + $0x10] sm:$0xff]
        %v270 = vld [vmem:[%s0 + $0x18] sm:$0xff]
        %vm271 = vcmask 130048
        %v273 = vsel %vm271, %v267, 0
        %v276 = vsel %vm271, %v268, 0
        %v279 = vsel %vm271, %v269, 0
        %v282 = vsel %vm271, %v270, 0
        %v284 = vand.u32 %v237, 4294901760
        %285 = vmatprep.subr.mxu0 %v284
        %v286 = vand.u32 %v236, 4294901760
        %287 = vmatpush1.msra.mxu0 %v286
        %v288 = vand.u32 %v239, 4294901760
        %289 = vmatprep.subr.mxu0 %v288
        %v290 = vand.u32 %v238, 4294901760
        %291 = vmatpush1.msra.mxu0 %v290
        %292 = vmatprep.subr.mxu0 0.0
        %293 = vmatpush1.msra.mxu0 0.0
        %294 = vmatprep.subr.mxu0 0.0
        %295 = vmatpush1.msra.mxu0 0.0
        %296 = vmatprep.subr.mxu0 0.0
        %297 = vmatpush1.msra.mxu0 0.0
        %298 = vmatprep.subr.mxu0 0.0
        %299 = vmatpush1.msra.mxu0 0.0
        %300 = vmatprep.subr.mxu0 0.0
        %301 = vmatpush1.msra.mxu0 0.0
        %302 = vmatprep.subr.mxu0 0.0
        %303 = vmatpush1.msra.mxu0 0.0
        %304 = vmatprep.subr.mxu0 0.0
        %305 = vmatpush1.msra.mxu0 0.0
        %306 = vmatprep.subr.mxu0 0.0
        %307 = vmatpush1.msra.mxu0 0.0
        %308 = vmatprep.subr.mxu0 0.0
        %309 = vmatpush1.msra.mxu0 0.0
        %310 = vmatprep.subr.mxu0 0.0
        %311 = vmatpush1.msra.mxu0 0.0
        %312 = vmatprep.subr.mxu0 0.0
        %313 = vmatpush1.msra.mxu0 0.0
        %314 = vmatprep.subr.mxu0 0.0
        %315 = vmatpush1.msra.mxu0 0.0
        %316 = vmatprep.subr.mxu0 0.0
        %317 = vmatpush1.msra.mxu0 0.0
        %318 = vmatprep.subr.mxu0 0.0
        %319 = vmatpush1.msra.mxu0 0.0
        %320 = vmatprep.subr.mxu0 0.0
        %321 = vmatpush1.msra.mxu0 0.0
        %322 = vmatprep.subr.mxu0 0.0
        %323 = vmatpush1.msra.mxu0 0.0
        %324 = vmatprep.subr.mxu0 0.0
        %325 = vmatpush1.msra.mxu0 0.0
        %326 = vmatprep.subr.mxu0 0.0
        %327 = vmatpush1.msra.mxu0 0.0
        %328 = vmatprep.subr.mxu0 0.0
        %329 = vmatpush1.msra.mxu0 0.0
        %330 = vmatprep.subr.mxu0 0.0
        %331 = vmatpush1.msra.mxu0 0.0
        %332 = vmatprep.subr.mxu0 0.0
        %333 = vmatpush1.msra.mxu0 0.0
        %334 = vmatprep.subr.mxu0 0.0
        %335 = vmatpush1.msra.mxu0 0.0
        %336 = vmatprep.subr.mxu0 0.0
        %337 = vmatpush1.msra.mxu0 0.0
        %338 = vmatprep.subr.mxu0 0.0
        %339 = vmatpush1.msra.mxu0 0.0
        %340 = vmatprep.subr.mxu0 0.0
        %341 = vmatpush1.msra.mxu0 0.0
        %342 = vmatprep.subr.mxu0 0.0
        %343 = vmatpush1.msra.mxu0 0.0
        %344 = vmatprep.subr.mxu0 0.0
        %345 = vmatpush1.msra.mxu0 0.0
        %346 = vmatprep.subr.mxu0 0.0
        %347 = vmatpush1.msra.mxu0 0.0
        %348 = vmatprep.subr.mxu0 0.0
        %349 = vmatpush1.msra.mxu0 0.0
        %350 = vmatprep.subr.mxu0 0.0
        %351 = vmatpush1.msra.mxu0 0.0
        %352 = vmatprep.mubr.f32.mxu0 0.0
        %v353 = vand.u32 %v273, 4294901760
        %v354 = vsub.f32 %v273, %v353
        %v355 = vand.u32 %v354, 4294901760
        %v356 = vsub.f32 %v354, %v355
        %v357 = vand.u32 %v356, 4294901760
        %358 = vmatmul.mubr.f32.gmra.mrb[0].mxu0 %v357
        %v359 = vpop.f32.mrb[0].mxu0
        %v360 = vadd.f32 0.0, %v359
        %v361 = vpop.f32.mrb[0].mxu0
        %v362 = vadd.f32 0.0, %v361
        %363 = vmatprep.mubr.f32.mxu0 0.0
        %v364 = vand.u32 %v276, 4294901760
        %v365 = vsub.f32 %v276, %v364
        %v366 = vand.u32 %v365, 4294901760
        %v367 = vsub.f32 %v365, %v366
        %v368 = vand.u32 %v367, 4294901760
        %369 = vmatmul.mubr.f32.gmra.mrb[0].mxu0 %v368
        %v370 = vpop.f32.mrb[0].mxu0
        %v371 = vadd.f32 0.0, %v370
        %v372 = vpop.f32.mrb[0].mxu0
        %v373 = vadd.f32 0.0, %v372
        %374 = vmatprep.mubr.f32.mxu0 0.0
        %v375 = vand.u32 %v279, 4294901760
        %v376 = vsub.f32 %v279, %v375
        %v377 = vand.u32 %v376, 4294901760
        %v378 = vsub.f32 %v376, %v377
        %v379 = vand.u32 %v378, 4294901760
        %380 = vmatmul.mubr.f32.gmra.mrb[0].mxu0 %v379
        %v381 = vpop.f32.mrb[0].mxu0
        %v382 = vadd.f32 0.0, %v381
        %v383 = vpop.f32.mrb[0].mxu0
        %v384 = vadd.f32 0.0, %v383
        %385 = vmatprep.mubr.f32.mxu0 0.0
        %v386 = vand.u32 %v282, 4294901760
        %v387 = vsub.f32 %v282, %v386
        %v388 = vand.u32 %v387, 4294901760
        %v389 = vsub.f32 %v387, %v388
        %v390 = vand.u32 %v389, 4294901760
        %391 = vmatmul.mubr.f32.gmra.mrb[0].mxu0 %v390
        %v392 = vpop.f32.mrb[0].mxu0
        %v393 = vadd.f32 0.0, %v392
        %v394 = vpop.f32.mrb[0].mxu0
        %v395 = vadd.f32 0.0, %v394
        %396 = vdwg.mxu0
        %v397 = vand.u32 %v237, 4294901760
        %v398 = vsub.f32 %v237, %v397
        %v399 = vand.u32 %v398, 4294901760
        %v400 = vsub.f32 %v398, %v399
        %v401 = vand.u32 %v400, 4294901760
        %402 = vmatprep.subr.mxu0 %v401
        %v403 = vand.u32 %v236, 4294901760
        %v404 = vsub.f32 %v236, %v403
        %v405 = vand.u32 %v404, 4294901760
        %v406 = vsub.f32 %v404, %v405
        %v407 = vand.u32 %v406, 4294901760
        %408 = vmatpush1.msra.mxu0 %v407
        %v409 = vand.u32 %v239, 4294901760
        %v410 = vsub.f32 %v239, %v409
        %v411 = vand.u32 %v410, 4294901760
        %v412 = vsub.f32 %v410, %v411
        %v413 = vand.u32 %v412, 4294901760
        %414 = vmatprep.subr.mxu0 %v413
        %v415 = vand.u32 %v238, 4294901760
        %v416 = vsub.f32 %v238, %v415
        %v417 = vand.u32 %v416, 4294901760
        %v418 = vsub.f32 %v416, %v417
        %v419 = vand.u32 %v418, 4294901760
        %420 = vmatpush1.msra.mxu0 %v419
        %421 = vmatprep.subr.mxu0 0.0
        %422 = vmatpush1.msra.mxu0 0.0
        %423 = vmatprep.subr.mxu0 0.0
        %424 = vmatpush1.msra.mxu0 0.0
        %425 = vmatprep.subr.mxu0 0.0
        %426 = vmatpush1.msra.mxu0 0.0
        %427 = vmatprep.subr.mxu0 0.0
        %428 = vmatpush1.msra.mxu0 0.0
        %429 = vmatprep.subr.mxu0 0.0
        %430 = vmatpush1.msra.mxu0 0.0
        %431 = vmatprep.subr.mxu0 0.0
        %432 = vmatpush1.msra.mxu0 0.0
        %433 = vmatprep.subr.mxu0 0.0
        %434 = vmatpush1.msra.mxu0 0.0
        %435 = vmatprep.subr.mxu0 0.0
        %436 = vmatpush1.msra.mxu0 0.0
        %437 = vmatprep.subr.mxu0 0.0
        %438 = vmatpush1.msra.mxu0 0.0
        %439 = vmatprep.subr.mxu0 0.0
        %440 = vmatpush1.msra.mxu0 0.0
        %441 = vmatprep.subr.mxu0 0.0
        %442 = vmatpush1.msra.mxu0 0.0
        %443 = vmatprep.subr.mxu0 0.0
        %444 = vmatpush1.msra.mxu0 0.0
        %445 = vmatprep.subr.mxu0 0.0
        %446 = vmatpush1.msra.mxu0 0.0
        %447 = vmatprep.subr.mxu0 0.0
        %448 = vmatpush1.msra.mxu0 0.0
        %449 = vmatprep.subr.mxu0 0.0
        %450 = vmatpush1.msra.mxu0 0.0
        %451 = vmatprep.subr.mxu0 0.0
        %452 = vmatpush1.msra.mxu0 0.0
        %453 = vmatprep.subr.mxu0 0.0
        %454 = vmatpush1.msra.mxu0 0.0
        %455 = vmatprep.subr.mxu0 0.0
        %456 = vmatpush1.msra.mxu0 0.0
        %457 = vmatprep.subr.mxu0 0.0
        %458 = vmatpush1.msra.mxu0 0.0
        %459 = vmatprep.subr.mxu0 0.0
        %460 = vmatpush1.msra.mxu0 0.0
        %461 = vmatprep.subr.mxu0 0.0
        %462 = vmatpush1.msra.mxu0 0.0
        %463 = vmatprep.subr.mxu0 0.0
        %464 = vmatpush1.msra.mxu0 0.0
        %465 = vmatprep.subr.mxu0 0.0
        %466 = vmatpush1.msra.mxu0 0.0
        %467 = vmatprep.subr.mxu0 0.0
        %468 = vmatpush1.msra.mxu0 0.0
        %469 = vmatprep.subr.mxu0 0.0
        %470 = vmatpush1.msra.mxu0 0.0
        %471 = vmatprep.subr.mxu0 0.0
        %472 = vmatpush1.msra.mxu0 0.0
        %473 = vmatprep.subr.mxu0 0.0
        %474 = vmatpush1.msra.mxu0 0.0
        %475 = vmatprep.subr.mxu0 0.0
        %476 = vmatpush1.msra.mxu0 0.0
        %477 = vmatprep.subr.mxu0 0.0
        %478 = vmatpush1.msra.mxu0 0.0
        %479 = vmatprep.subr.mxu0 0.0
        %480 = vmatpush1.msra.mxu0 0.0
        %481 = vmatprep.mubr.f32.mxu0 0.0
        %v482 = vand.u32 %v273, 4294901760
        %483 = vmatmul.mubr.f32.gmra.mrb[0].mxu0 %v482
        %v484 = vpop.f32.mrb[0].mxu0
        %v485 = vadd.f32 %v360, %v484
        %v486 = vpop.f32.mrb[0].mxu0
        %v487 = vadd.f32 %v362, %v486
        %488 = vmatprep.mubr.f32.mxu0 0.0
        %v489 = vand.u32 %v276, 4294901760
        %490 = vmatmul.mubr.f32.gmra.mrb[0].mxu0 %v489
        %v491 = vpop.f32.mrb[0].mxu0
        %v492 = vadd.f32 %v371, %v491
        %v493 = vpop.f32.mrb[0].mxu0
        %v494 = vadd.f32 %v373, %v493
        %495 = vmatprep.mubr.f32.mxu0 0.0
        %v496 = vand.u32 %v279, 4294901760
        %497 = vmatmul.mubr.f32.gmra.mrb[0].mxu0 %v496
        %v498 = vpop.f32.mrb[0].mxu0
        %v499 = vadd.f32 %v382, %v498
        %v500 = vpop.f32.mrb[0].mxu0
        %v501 = vadd.f32 %v384, %v500
        %502 = vmatprep.mubr.f32.mxu0 0.0
        %v503 = vand.u32 %v282, 4294901760
        %504 = vmatmul.mubr.f32.gmra.mrb[0].mxu0 %v503
        %v505 = vpop.f32.mrb[0].mxu0
        %v506 = vadd.f32 %v393, %v505
        %v507 = vpop.f32.mrb[0].mxu0
        %v508 = vadd.f32 %v395, %v507
        %509 = vdwg.mxu0
        %v510 = vand.u32 %v237, 4294901760
        %v511 = vsub.f32 %v237, %v510
        %512 = vmatprep.subr.mxu0 %v511
        %v513 = vand.u32 %v236, 4294901760
        %v514 = vsub.f32 %v236, %v513
        %515 = vmatpush1.msra.mxu0 %v514
        %v516 = vand.u32 %v239, 4294901760
        %v517 = vsub.f32 %v239, %v516
        %518 = vmatprep.subr.mxu0 %v517
        %v519 = vand.u32 %v238, 4294901760
        %v520 = vsub.f32 %v238, %v519
        %521 = vmatpush1.msra.mxu0 %v520
        %522 = vmatprep.subr.mxu0 0.0
        %523 = vmatpush1.msra.mxu0 0.0
        %524 = vmatprep.subr.mxu0 0.0
        %525 = vmatpush1.msra.mxu0 0.0
        %526 = vmatprep.subr.mxu0 0.0
        %527 = vmatpush1.msra.mxu0 0.0
        %528 = vmatprep.subr.mxu0 0.0
        %529 = vmatpush1.msra.mxu0 0.0
        %530 = vmatprep.subr.mxu0 0.0
        %531 = vmatpush1.msra.mxu0 0.0
        %532 = vmatprep.subr.mxu0 0.0
        %533 = vmatpush1.msra.mxu0 0.0
        %534 = vmatprep.subr.mxu0 0.0
        %535 = vmatpush1.msra.mxu0 0.0
        %536 = vmatprep.subr.mxu0 0.0
        %537 = vmatpush1.msra.mxu0 0.0
        %538 = vmatprep.subr.mxu0 0.0
        %539 = vmatpush1.msra.mxu0 0.0
        %540 = vmatprep.subr.mxu0 0.0
        %541 = vmatpush1.msra.mxu0 0.0
        %542 = vmatprep.subr.mxu0 0.0
        %543 = vmatpush1.msra.mxu0 0.0
        %544 = vmatprep.subr.mxu0 0.0
        %545 = vmatpush1.msra.mxu0 0.0
        %546 = vmatprep.subr.mxu0 0.0
        %547 = vmatpush1.msra.mxu0 0.0
        %548 = vmatprep.subr.mxu0 0.0
        %549 = vmatpush1.msra.mxu0 0.0
        %550 = vmatprep.subr.mxu0 0.0
        %551 = vmatpush1.msra.mxu0 0.0
        %552 = vmatprep.subr.mxu0 0.0
        %553 = vmatpush1.msra.mxu0 0.0
        %554 = vmatprep.subr.mxu0 0.0
        %555 = vmatpush1.msra.mxu0 0.0
        %556 = vmatprep.subr.mxu0 0.0
        %557 = vmatpush1.msra.mxu0 0.0
        %558 = vmatprep.subr.mxu0 0.0
        %559 = vmatpush1.msra.mxu0 0.0
        %560 = vmatprep.subr.mxu0 0.0
        %561 = vmatpush1.msra.mxu0 0.0
        %562 = vmatprep.subr.mxu0 0.0
        %563 = vmatpush1.msra.mxu0 0.0
        %564 = vmatprep.subr.mxu0 0.0
        %565 = vmatpush1.msra.mxu0 0.0
        %566 = vmatprep.subr.mxu0 0.0
        %567 = vmatpush1.msra.mxu0 0.0
        %568 = vmatprep.subr.mxu0 0.0
        %569 = vmatpush1.msra.mxu0 0.0
        %570 = vmatprep.subr.mxu0 0.0
        %571 = vmatpush1.msra.mxu0 0.0
        %572 = vmatprep.subr.mxu0 0.0
        %573 = vmatpush1.msra.mxu0 0.0
        %574 = vmatprep.subr.mxu0 0.0
        %575 = vmatpush1.msra.mxu0 0.0
        %576 = vmatprep.subr.mxu0 0.0
        %577 = vmatpush1.msra.mxu0 0.0
        %578 = vmatprep.subr.mxu0 0.0
        %579 = vmatpush1.msra.mxu0 0.0
        %580 = vmatprep.subr.mxu0 0.0
        %581 = vmatpush1.msra.mxu0 0.0
        %582 = vmatprep.mubr.f32.mxu0 0.0
        %v583 = vand.u32 %v273, 4294901760
        %v584 = vsub.f32 %v273, %v583
        %585 = vmatmul.mubr.f32.gmra.mrb[0].mxu0 %v584
        %v586 = vpop.f32.mrb[0].mxu0
        %v587 = vadd.f32 %v485, %v586
        %v588 = vpop.f32.mrb[0].mxu0
        %v589 = vadd.f32 %v487, %v588
        %590 = vmatprep.mubr.f32.mxu0 0.0
        %v591 = vand.u32 %v276, 4294901760
        %v592 = vsub.f32 %v276, %v591
        %593 = vmatmul.mubr.f32.gmra.mrb[0].mxu0 %v592
        %v594 = vpop.f32.mrb[0].mxu0
        %v595 = vadd.f32 %v492, %v594
        %v596 = vpop.f32.mrb[0].mxu0
        %v597 = vadd.f32 %v494, %v596
        %598 = vmatprep.mubr.f32.mxu0 0.0
        %v599 = vand.u32 %v279, 4294901760
        %v600 = vsub.f32 %v279, %v599
        %601 = vmatmul.mubr.f32.gmra.mrb[0].mxu0 %v600
        %v602 = vpop.f32.mrb[0].mxu0
        %v603 = vadd.f32 %v499, %v602
        %v604 = vpop.f32.mrb[0].mxu0
        %v605 = vadd.f32 %v501, %v604
        %606 = vmatprep.mubr.f32.mxu0 0.0
        %v607 = vand.u32 %v282, 4294901760
        %v608 = vsub.f32 %v282, %v607
        %609 = vmatmul.mubr.f32.gmra.mrb[0].mxu0 %v608
        %v610 = vpop.f32.mrb[0].mxu0
        %v611 = vadd.f32 %v506, %v610
        %v612 = vpop.f32.mrb[0].mxu0
        %v613 = vadd.f32 %v508, %v612
        %614 = vdwg.mxu0
        %v615 = vand.u32 %v237, 4294901760
        %616 = vmatprep.subr.mxu0 %v615
        %v617 = vand.u32 %v236, 4294901760
        %618 = vmatpush1.msra.mxu0 %v617
        %v619 = vand.u32 %v239, 4294901760
        %620 = vmatprep.subr.mxu0 %v619
        %v621 = vand.u32 %v238, 4294901760
        %622 = vmatpush1.msra.mxu0 %v621
        %623 = vmatprep.subr.mxu0 0.0
        %624 = vmatpush1.msra.mxu0 0.0
        %625 = vmatprep.subr.mxu0 0.0
        %626 = vmatpush1.msra.mxu0 0.0
        %627 = vmatprep.subr.mxu0 0.0
        %628 = vmatpush1.msra.mxu0 0.0
        %629 = vmatprep.subr.mxu0 0.0
        %630 = vmatpush1.msra.mxu0 0.0
        %631 = vmatprep.subr.mxu0 0.0
        %632 = vmatpush1.msra.mxu0 0.0
        %633 = vmatprep.subr.mxu0 0.0
        %634 = vmatpush1.msra.mxu0 0.0
        %635 = vmatprep.subr.mxu0 0.0
        %636 = vmatpush1.msra.mxu0 0.0
        %637 = vmatprep.subr.mxu0 0.0
        %638 = vmatpush1.msra.mxu0 0.0
        %639 = vmatprep.subr.mxu0 0.0
        %640 = vmatpush1.msra.mxu0 0.0
        %641 = vmatprep.subr.mxu0 0.0
        %642 = vmatpush1.msra.mxu0 0.0
        %643 = vmatprep.subr.mxu0 0.0
        %644 = vmatpush1.msra.mxu0 0.0
        %645 = vmatprep.subr.mxu0 0.0
        %646 = vmatpush1.msra.mxu0 0.0
        %647 = vmatprep.subr.mxu0 0.0
        %648 = vmatpush1.msra.mxu0 0.0
        %649 = vmatprep.subr.mxu0 0.0
        %650 = vmatpush1.msra.mxu0 0.0
        %651 = vmatprep.subr.mxu0 0.0
        %652 = vmatpush1.msra.mxu0 0.0
        %653 = vmatprep.subr.mxu0 0.0
        %654 = vmatpush1.msra.mxu0 0.0
        %655 = vmatprep.subr.mxu0 0.0
        %656 = vmatpush1.msra.mxu0 0.0
        %657 = vmatprep.subr.mxu0 0.0
        %658 = vmatpush1.msra.mxu0 0.0
        %659 = vmatprep.subr.mxu0 0.0
        %660 = vmatpush1.msra.mxu0 0.0
        %661 = vmatprep.subr.mxu0 0.0
        %662 = vmatpush1.msra.mxu0 0.0
        %663 = vmatprep.subr.mxu0 0.0
        %664 = vmatpush1.msra.mxu0 0.0
        %665 = vmatprep.subr.mxu0 0.0
        %666 = vmatpush1.msra.mxu0 0.0
        %667 = vmatprep.subr.mxu0 0.0
        %668 = vmatpush1.msra.mxu0 0.0
        %669 = vmatprep.subr.mxu0 0.0
        %670 = vmatpush1.msra.mxu0 0.0
        %671 = vmatprep.subr.mxu0 0.0
        %672 = vmatpush1.msra.mxu0 0.0
        %673 = vmatprep.subr.mxu0 0.0
        %674 = vmatpush1.msra.mxu0 0.0
        %675 = vmatprep.subr.mxu0 0.0
        %676 = vmatpush1.msra.mxu0 0.0
        %677 = vmatprep.subr.mxu0 0.0
        %678 = vmatpush1.msra.mxu0 0.0
        %679 = vmatprep.subr.mxu0 0.0
        %680 = vmatpush1.msra.mxu0 0.0
        %681 = vmatprep.subr.mxu0 0.0
        %682 = vmatpush1.msra.mxu0 0.0
        %683 = vmatprep.mubr.f32.mxu0 0.0
        %v684 = vand.u32 %v273, 4294901760
        %v685 = vsub.f32 %v273, %v684
        %v686 = vand.u32 %v685, 4294901760
        %687 = vmatmul.mubr.f32.gmra.mrb[0].mxu0 %v686
        %v688 = vpop.f32.mrb[0].mxu0
        %v689 = vadd.f32 %v587, %v688
        %v690 = vpop.f32.mrb[0].mxu0
        %v691 = vadd.f32 %v589, %v690
        %692 = vmatprep.mubr.f32.mxu0 0.0
        %v693 = vand.u32 %v276, 4294901760
        %v694 = vsub.f32 %v276, %v693
        %v695 = vand.u32 %v694, 4294901760
        %696 = vmatmul.mubr.f32.gmra.mrb[0].mxu0 %v695
        %v697 = vpop.f32.mrb[0].mxu0
        %v698 = vadd.f32 %v595, %v697
        %v699 = vpop.f32.mrb[0].mxu0
        %v700 = vadd.f32 %v597, %v699
        %701 = vmatprep.mubr.f32.mxu0 0.0
        %v702 = vand.u32 %v279, 4294901760
        %v703 = vsub.f32 %v279, %v702
        %v704 = vand.u32 %v703, 4294901760
        %705 = vmatmul.mubr.f32.gmra.mrb[0].mxu0 %v704
        %v706 = vpop.f32.mrb[0].mxu0
        %v707 = vadd.f32 %v603, %v706
        %v708 = vpop.f32.mrb[0].mxu0
        %v709 = vadd.f32 %v605, %v708
        %710 = vmatprep.mubr.f32.mxu0 0.0
        %v711 = vand.u32 %v282, 4294901760
        %v712 = vsub.f32 %v282, %v711
        %v713 = vand.u32 %v712, 4294901760
        %714 = vmatmul.mubr.f32.gmra.mrb[0].mxu0 %v713
        %v715 = vpop.f32.mrb[0].mxu0
        %v716 = vadd.f32 %v611, %v715
        %v717 = vpop.f32.mrb[0].mxu0
        %v718 = vadd.f32 %v613, %v717
        %719 = vdwg.mxu0
        %v720 = vand.u32 %v237, 4294901760
        %v721 = vsub.f32 %v237, %v720
        %v722 = vand.u32 %v721, 4294901760
        %723 = vmatprep.subr.mxu0 %v722
        %v724 = vand.u32 %v236, 4294901760
        %v725 = vsub.f32 %v236, %v724
        %v726 = vand.u32 %v725, 4294901760
        %727 = vmatpush1.msra.mxu0 %v726
        %v728 = vand.u32 %v239, 4294901760
        %v729 = vsub.f32 %v239, %v728
        %v730 = vand.u32 %v729, 4294901760
        %731 = vmatprep.subr.mxu0 %v730
        %v732 = vand.u32 %v238, 4294901760
        %v733 = vsub.f32 %v238, %v732
        %v734 = vand.u32 %v733, 4294901760
        %735 = vmatpush1.msra.mxu0 %v734
        %736 = vmatprep.subr.mxu0 0.0
        %737 = vmatpush1.msra.mxu0 0.0
        %738 = vmatprep.subr.mxu0 0.0
        %739 = vmatpush1.msra.mxu0 0.0
        %740 = vmatprep.subr.mxu0 0.0
        %741 = vmatpush1.msra.mxu0 0.0
        %742 = vmatprep.subr.mxu0 0.0
        %743 = vmatpush1.msra.mxu0 0.0
        %744 = vmatprep.subr.mxu0 0.0
        %745 = vmatpush1.msra.mxu0 0.0
        %746 = vmatprep.subr.mxu0 0.0
        %747 = vmatpush1.msra.mxu0 0.0
        %748 = vmatprep.subr.mxu0 0.0
        %749 = vmatpush1.msra.mxu0 0.0
        %750 = vmatprep.subr.mxu0 0.0
        %751 = vmatpush1.msra.mxu0 0.0
        %752 = vmatprep.subr.mxu0 0.0
        %753 = vmatpush1.msra.mxu0 0.0
        %754 = vmatprep.subr.mxu0 0.0
        %755 = vmatpush1.msra.mxu0 0.0
        %756 = vmatprep.subr.mxu0 0.0
        %757 = vmatpush1.msra.mxu0 0.0
        %758 = vmatprep.subr.mxu0 0.0
        %759 = vmatpush1.msra.mxu0 0.0
        %760 = vmatprep.subr.mxu0 0.0
        %761 = vmatpush1.msra.mxu0 0.0
        %762 = vmatprep.subr.mxu0 0.0
        %763 = vmatpush1.msra.mxu0 0.0
        %764 = vmatprep.subr.mxu0 0.0
        %765 = vmatpush1.msra.mxu0 0.0
        %766 = vmatprep.subr.mxu0 0.0
        %767 = vmatpush1.msra.mxu0 0.0
        %768 = vmatprep.subr.mxu0 0.0
        %769 = vmatpush1.msra.mxu0 0.0
        %770 = vmatprep.subr.mxu0 0.0
        %771 = vmatpush1.msra.mxu0 0.0
        %772 = vmatprep.subr.mxu0 0.0
        %773 = vmatpush1.msra.mxu0 0.0
        %774 = vmatprep.subr.mxu0 0.0
        %775 = vmatpush1.msra.mxu0 0.0
        %776 = vmatprep.subr.mxu0 0.0
        %777 = vmatpush1.msra.mxu0 0.0
        %778 = vmatprep.subr.mxu0 0.0
        %779 = vmatpush1.msra.mxu0 0.0
        %780 = vmatprep.subr.mxu0 0.0
        %781 = vmatpush1.msra.mxu0 0.0
        %782 = vmatprep.subr.mxu0 0.0
        %783 = vmatpush1.msra.mxu0 0.0
        %784 = vmatprep.subr.mxu0 0.0
        %785 = vmatpush1.msra.mxu0 0.0
        %786 = vmatprep.subr.mxu0 0.0
        %787 = vmatpush1.msra.mxu0 0.0
        %788 = vmatprep.subr.mxu0 0.0
        %789 = vmatpush1.msra.mxu0 0.0
        %790 = vmatprep.subr.mxu0 0.0
        %791 = vmatpush1.msra.mxu0 0.0
        %792 = vmatprep.subr.mxu0 0.0
        %793 = vmatpush1.msra.mxu0 0.0
        %794 = vmatprep.subr.mxu0 0.0
        %795 = vmatpush1.msra.mxu0 0.0
        %796 = vmatprep.mubr.f32.mxu0 0.0
        %v797 = vand.u32 %v273, 4294901760
        %798 = vmatmul.mubr.f32.gmra.mrb[0].mxu0 %v797
        %v799 = vpop.f32.mrb[0].mxu0
        %v800 = vadd.f32 %v689, %v799
        %v801 = vpop.f32.mrb[0].mxu0
        %v802 = vadd.f32 %v691, %v801
        %803 = vmatprep.mubr.f32.mxu0 0.0
        %v804 = vand.u32 %v276, 4294901760
        %805 = vmatmul.mubr.f32.gmra.mrb[0].mxu0 %v804
        %v806 = vpop.f32.mrb[0].mxu0
        %v807 = vadd.f32 %v698, %v806
        %v808 = vpop.f32.mrb[0].mxu0
        %v809 = vadd.f32 %v700, %v808
        %810 = vmatprep.mubr.f32.mxu0 0.0
        %v811 = vand.u32 %v279, 4294901760
        %812 = vmatmul.mubr.f32.gmra.mrb[0].mxu0 %v811
        %v813 = vpop.f32.mrb[0].mxu0
        %v814 = vadd.f32 %v707, %v813
        %v815 = vpop.f32.mrb[0].mxu0
        %v816 = vadd.f32 %v709, %v815
        %817 = vmatprep.mubr.f32.mxu0 0.0
        %v818 = vand.u32 %v282, 4294901760
        %819 = vmatmul.mubr.f32.gmra.mrb[0].mxu0 %v818
        %v820 = vpop.f32.mrb[0].mxu0
        %v821 = vadd.f32 %v716, %v820
        %v822 = vpop.f32.mrb[0].mxu0
        %v823 = vadd.f32 %v718, %v822
        %824 = vdwg.mxu0
        %v825 = vand.u32 %v237, 4294901760
        %826 = vmatprep.subr.mxu0 %v825
        %v827 = vand.u32 %v236, 4294901760
        %828 = vmatpush1.msra.mxu0 %v827
        %v829 = vand.u32 %v239, 4294901760
        %830 = vmatprep.subr.mxu0 %v829
        %v831 = vand.u32 %v238, 4294901760
        %832 = vmatpush1.msra.mxu0 %v831
        %833 = vmatprep.subr.mxu0 0.0
        %834 = vmatpush1.msra.mxu0 0.0
        %835 = vmatprep.subr.mxu0 0.0
        %836 = vmatpush1.msra.mxu0 0.0
        %837 = vmatprep.subr.mxu0 0.0
        %838 = vmatpush1.msra.mxu0 0.0
        %839 = vmatprep.subr.mxu0 0.0
        %840 = vmatpush1.msra.mxu0 0.0
        %841 = vmatprep.subr.mxu0 0.0
        %842 = vmatpush1.msra.mxu0 0.0
        %843 = vmatprep.subr.mxu0 0.0
        %844 = vmatpush1.msra.mxu0 0.0
        %845 = vmatprep.subr.mxu0 0.0
        %846 = vmatpush1.msra.mxu0 0.0
        %847 = vmatprep.subr.mxu0 0.0
        %848 = vmatpush1.msra.mxu0 0.0
        %849 = vmatprep.subr.mxu0 0.0
        %850 = vmatpush1.msra.mxu0 0.0
        %851 = vmatprep.subr.mxu0 0.0
        %852 = vmatpush1.msra.mxu0 0.0
        %853 = vmatprep.subr.mxu0 0.0
        %854 = vmatpush1.msra.mxu0 0.0
        %855 = vmatprep.subr.mxu0 0.0
        %856 = vmatpush1.msra.mxu0 0.0
        %857 = vmatprep.subr.mxu0 0.0
        %858 = vmatpush1.msra.mxu0 0.0
        %859 = vmatprep.subr.mxu0 0.0
        %860 = vmatpush1.msra.mxu0 0.0
        %861 = vmatprep.subr.mxu0 0.0
        %862 = vmatpush1.msra.mxu0 0.0
        %863 = vmatprep.subr.mxu0 0.0
        %864 = vmatpush1.msra.mxu0 0.0
        %865 = vmatprep.subr.mxu0 0.0
        %866 = vmatpush1.msra.mxu0 0.0
        %867 = vmatprep.subr.mxu0 0.0
        %868 = vmatpush1.msra.mxu0 0.0
        %869 = vmatprep.subr.mxu0 0.0
        %870 = vmatpush1.msra.mxu0 0.0
        %871 = vmatprep.subr.mxu0 0.0
        %872 = vmatpush1.msra.mxu0 0.0
        %873 = vmatprep.subr.mxu0 0.0
        %874 = vmatpush1.msra.mxu0 0.0
        %875 = vmatprep.subr.mxu0 0.0
        %876 = vmatpush1.msra.mxu0 0.0
        %877 = vmatprep.subr.mxu0 0.0
        %878 = vmatpush1.msra.mxu0 0.0
        %879 = vmatprep.subr.mxu0 0.0
        %880 = vmatpush1.msra.mxu0 0.0
        %881 = vmatprep.subr.mxu0 0.0
        %882 = vmatpush1.msra.mxu0 0.0
        %883 = vmatprep.subr.mxu0 0.0
        %884 = vmatpush1.msra.mxu0 0.0
        %885 = vmatprep.subr.mxu0 0.0
        %886 = vmatpush1.msra.mxu0 0.0
        %887 = vmatprep.subr.mxu0 0.0
        %888 = vmatpush1.msra.mxu0 0.0
        %889 = vmatprep.subr.mxu0 0.0
        %890 = vmatpush1.msra.mxu0 0.0
        %891 = vmatprep.subr.mxu0 0.0
        %892 = vmatpush1.msra.mxu0 0.0
        %893 = vmatprep.mubr.f32.mxu0 0.0
        %v894 = vand.u32 %v273, 4294901760
        %895 = vmatmul.mubr.f32.gmra.mrb[0].mxu0 %v894
        %v896 = vpop.f32.mrb[0].mxu0
        %v897 = vadd.f32 %v800, %v896
        %v898 = vpop.f32.mrb[0].mxu0
        %v899 = vadd.f32 %v802, %v898
        %900 = vmatprep.mubr.f32.mxu0 0.0
        %v901 = vand.u32 %v276, 4294901760
        %902 = vmatmul.mubr.f32.gmra.mrb[0].mxu0 %v901
        %v903 = vpop.f32.mrb[0].mxu0
        %v904 = vadd.f32 %v807, %v903
        %v905 = vpop.f32.mrb[0].mxu0
        %v906 = vadd.f32 %v809, %v905
        %907 = vmatprep.mubr.f32.mxu0 0.0
        %v908 = vand.u32 %v279, 4294901760
        %909 = vmatmul.mubr.f32.gmra.mrb[0].mxu0 %v908
        %v910 = vpop.f32.mrb[0].mxu0
        %v911 = vadd.f32 %v814, %v910
        %v912 = vpop.f32.mrb[0].mxu0
        %v913 = vadd.f32 %v816, %v912
        %914 = vmatprep.mubr.f32.mxu0 0.0
        %v915 = vand.u32 %v282, 4294901760
        %916 = vmatmul.mubr.f32.gmra.mrb[0].mxu0 %v915
        %v917 = vpop.f32.mrb[0].mxu0
        %v918 = vadd.f32 %v821, %v917
        %v919 = vpop.f32.mrb[0].mxu0
        %v920 = vadd.f32 %v823, %v919
        %921 = vdwg.mxu0
        %v922 = vld [vmem:[%s1] sm:$0xff]
        %v923 = vld [vmem:[%s1 + $0x8] sm:$0xff]
        %v924 = vld [vmem:[%s1 + $0x10] sm:$0xff]
        %v925 = vld [vmem:[%s1 + $0x18] sm:$0xff]
        %vm926 = vcmask 195584
        %v928 = vsel %vm926, %v922, 0
        %v931 = vsel %vm926, %v923, 0
        %v934 = vsel %vm926, %v924, 0
        %v937 = vsel %vm926, %v925, 0
        %v939 = vand.u32 %v262, 4294901760
        %940 = vmatprep.subr.mxu0 %v939
        %v941 = vand.u32 %v261, 4294901760
        %942 = vmatpush1.msra.mxu0 %v941
        %v943 = vand.u32 %v264, 4294901760
        %944 = vmatprep.subr.mxu0 %v943
        %v945 = vand.u32 %v263, 4294901760
        %946 = vmatpush1.msra.mxu0 %v945
        %v947 = vand.u32 %v266, 4294901760
        %948 = vmatprep.subr.mxu0 %v947
        %v949 = vand.u32 %v265, 4294901760
        %950 = vmatpush1.msra.mxu0 %v949
        %951 = vmatprep.subr.mxu0 0.0
        %952 = vmatpush1.msra.mxu0 0.0
        %953 = vmatprep.subr.mxu0 0.0
        %954 = vmatpush1.msra.mxu0 0.0
        %955 = vmatprep.subr.mxu0 0.0
        %956 = vmatpush1.msra.mxu0 0.0
        %957 = vmatprep.subr.mxu0 0.0
        %958 = vmatpush1.msra.mxu0 0.0
        %959 = vmatprep.subr.mxu0 0.0
        %960 = vmatpush1.msra.mxu0 0.0
        %961 = vmatprep.subr.mxu0 0.0
        %962 = vmatpush1.msra.mxu0 0.0
        %963 = vmatprep.subr.mxu0 0.0
        %964 = vmatpush1.msra.mxu0 0.0
        %965 = vmatprep.subr.mxu0 0.0
        %966 = vmatpush1.msra.mxu0 0.0
        %967 = vmatprep.subr.mxu0 0.0
        %968 = vmatpush1.msra.mxu0 0.0
        %969 = vmatprep.subr.mxu0 0.0
        %970 = vmatpush1.msra.mxu0 0.0
        %971 = vmatprep.subr.mxu0 0.0
        %972 = vmatpush1.msra.mxu0 0.0
        %973 = vmatprep.subr.mxu0 0.0
        %974 = vmatpush1.msra.mxu0 0.0
        %975 = vmatprep.subr.mxu0 0.0
        %976 = vmatpush1.msra.mxu0 0.0
        %977 = vmatprep.subr.mxu0 0.0
        %978 = vmatpush1.msra.mxu0 0.0
        %979 = vmatprep.subr.mxu0 0.0
        %980 = vmatpush1.msra.mxu0 0.0
        %981 = vmatprep.subr.mxu0 0.0
        %982 = vmatpush1.msra.mxu0 0.0
        %983 = vmatprep.subr.mxu0 0.0
        %984 = vmatpush1.msra.mxu0 0.0
        %985 = vmatprep.subr.mxu0 0.0
        %986 = vmatpush1.msra.mxu0 0.0
        %987 = vmatprep.subr.mxu0 0.0
        %988 = vmatpush1.msra.mxu0 0.0
        %989 = vmatprep.subr.mxu0 0.0
        %990 = vmatpush1.msra.mxu0 0.0
        %991 = vmatprep.subr.mxu0 0.0
        %992 = vmatpush1.msra.mxu0 0.0
        %993 = vmatprep.subr.mxu0 0.0
        %994 = vmatpush1.msra.mxu0 0.0
        %995 = vmatprep.subr.mxu0 0.0
        %996 = vmatpush1.msra.mxu0 0.0
        %997 = vmatprep.subr.mxu0 0.0
        %998 = vmatpush1.msra.mxu0 0.0
        %999 = vmatprep.subr.mxu0 0.0
        %1000 = vmatpush1.msra.mxu0 0.0
        %1001 = vmatprep.subr.mxu0 0.0
        %1002 = vmatpush1.msra.mxu0 0.0
        %1003 = vmatprep.subr.mxu0 0.0
        %1004 = vmatpush1.msra.mxu0 0.0
        %1005 = vmatprep.subr.mxu0 0.0
        %1006 = vmatpush1.msra.mxu0 0.0
        %1007 = vmatprep.subr.mxu0 0.0
        %1008 = vmatpush1.msra.mxu0 0.0
        %1009 = vmatprep.mubr.f32.mxu0 0.0
        %v1010 = vand.u32 %v928, 4294901760
        %v1011 = vsub.f32 %v928, %v1010
        %v1012 = vand.u32 %v1011, 4294901760
        %v1013 = vsub.f32 %v1011, %v1012
        %v1014 = vand.u32 %v1013, 4294901760
        %1015 = vmatmul.mubr.f32.gmra.mrb[0].mxu0 %v1014
        %v1016 = vpop.f32.mrb[0].mxu0
        %v1017 = vadd.f32 0.0, %v1016
        %v1018 = vpop.f32.mrb[0].mxu0
        %v1019 = vadd.f32 0.0, %v1018
        %1020 = vmatprep.mubr.f32.mxu0 0.0
        %v1021 = vand.u32 %v931, 4294901760
        %v1022 = vsub.f32 %v931, %v1021
        %v1023 = vand.u32 %v1022, 4294901760
        %v1024 = vsub.f32 %v1022, %v1023
        %v1025 = vand.u32 %v1024, 4294901760
        %1026 = vmatmul.mubr.f32.gmra.mrb[0].mxu0 %v1025
        %v1027 = vpop.f32.mrb[0].mxu0
        %v1028 = vadd.f32 0.0, %v1027
        %v1029 = vpop.f32.mrb[0].mxu0
        %v1030 = vadd.f32 0.0, %v1029
        %1031 = vmatprep.mubr.f32.mxu0 0.0
        %v1032 = vand.u32 %v934, 4294901760
        %v1033 = vsub.f32 %v934, %v1032
        %v1034 = vand.u32 %v1033, 4294901760
        %v1035 = vsub.f32 %v1033, %v1034
        %v1036 = vand.u32 %v1035, 4294901760
        %1037 = vmatmul.mubr.f32.gmra.mrb[0].mxu0 %v1036
        %v1038 = vpop.f32.mrb[0].mxu0
        %v1039 = vadd.f32 0.0, %v1038
        %v1040 = vpop.f32.mrb[0].mxu0
        %v1041 = vadd.f32 0.0, %v1040
        %1042 = vmatprep.mubr.f32.mxu0 0.0
        %v1043 = vand.u32 %v937, 4294901760
        %v1044 = vsub.f32 %v937, %v1043
        %v1045 = vand.u32 %v1044, 4294901760
        %v1046 = vsub.f32 %v1044, %v1045
        %v1047 = vand.u32 %v1046, 4294901760
        %1048 = vmatmul.mubr.f32.gmra.mrb[0].mxu0 %v1047
        %v1049 = vpop.f32.mrb[0].mxu0
        %v1050 = vadd.f32 0.0, %v1049
        %v1051 = vpop.f32.mrb[0].mxu0
        %v1052 = vadd.f32 0.0, %v1051
        %1053 = vdwg.mxu0
        %v1054 = vand.u32 %v262, 4294901760
        %v1055 = vsub.f32 %v262, %v1054
        %v1056 = vand.u32 %v1055, 4294901760
        %v1057 = vsub.f32 %v1055, %v1056
        %v1058 = vand.u32 %v1057, 4294901760
        %1059 = vmatprep.subr.mxu0 %v1058
        %v1060 = vand.u32 %v261, 4294901760
        %v1061 = vsub.f32 %v261, %v1060
        %v1062 = vand.u32 %v1061, 4294901760
        %v1063 = vsub.f32 %v1061, %v1062
        %v1064 = vand.u32 %v1063, 4294901760
        %1065 = vmatpush1.msra.mxu0 %v1064
        %v1066 = vand.u32 %v264, 4294901760
        %v1067 = vsub.f32 %v264, %v1066
        %v1068 = vand.u32 %v1067, 4294901760
        %v1069 = vsub.f32 %v1067, %v1068
        %v1070 = vand.u32 %v1069, 4294901760
        %1071 = vmatprep.subr.mxu0 %v1070
        %v1072 = vand.u32 %v263, 4294901760
        %v1073 = vsub.f32 %v263, %v1072
        %v1074 = vand.u32 %v1073, 4294901760
        %v1075 = vsub.f32 %v1073, %v1074
        %v1076 = vand.u32 %v1075, 4294901760
        %1077 = vmatpush1.msra.mxu0 %v1076
        %v1078 = vand.u32 %v266, 4294901760
        %v1079 = vsub.f32 %v266, %v1078
        %v1080 = vand.u32 %v1079, 4294901760
        %v1081 = vsub.f32 %v1079, %v1080
        %v1082 = vand.u32 %v1081, 4294901760
        %1083 = vmatprep.subr.mxu0 %v1082
        %v1084 = vand.u32 %v265, 4294901760
        %v1085 = vsub.f32 %v265, %v1084
        %v1086 = vand.u32 %v1085, 4294901760
        %v1087 = vsub.f32 %v1085, %v1086
        %v1088 = vand.u32 %v1087, 4294901760
        %1089 = vmatpush1.msra.mxu0 %v1088
        %1090 = vmatprep.subr.mxu0 0.0
        %1091 = vmatpush1.msra.mxu0 0.0
        %1092 = vmatprep.subr.mxu0 0.0
        %1093 = vmatpush1.msra.mxu0 0.0
        %1094 = vmatprep.subr.mxu0 0.0
        %1095 = vmatpush1.msra.mxu0 0.0
        %1096 = vmatprep.subr.mxu0 0.0
        %1097 = vmatpush1.msra.mxu0 0.0
        %1098 = vmatprep.subr.mxu0 0.0
        %1099 = vmatpush1.msra.mxu0 0.0
        %1100 = vmatprep.subr.mxu0 0.0
        %1101 = vmatpush1.msra.mxu0 0.0
        %1102 = vmatprep.subr.mxu0 0.0
        %1103 = vmatpush1.msra.mxu0 0.0
        %1104 = vmatprep.subr.mxu0 0.0
        %1105 = vmatpush1.msra.mxu0 0.0
        %1106 = vmatprep.subr.mxu0 0.0
        %1107 = vmatpush1.msra.mxu0 0.0
        %1108 = vmatprep.subr.mxu0 0.0
        %1109 = vmatpush1.msra.mxu0 0.0
        %1110 = vmatprep.subr.mxu0 0.0
        %1111 = vmatpush1.msra.mxu0 0.0
        %1112 = vmatprep.subr.mxu0 0.0
        %1113 = vmatpush1.msra.mxu0 0.0
        %1114 = vmatprep.subr.mxu0 0.0
        %1115 = vmatpush1.msra.mxu0 0.0
        %1116 = vmatprep.subr.mxu0 0.0
        %1117 = vmatpush1.msra.mxu0 0.0
        %1118 = vmatprep.subr.mxu0 0.0
        %1119 = vmatpush1.msra.mxu0 0.0
        %1120 = vmatprep.subr.mxu0 0.0
        %1121 = vmatpush1.msra.mxu0 0.0
        %1122 = vmatprep.subr.mxu0 0.0
        %1123 = vmatpush1.msra.mxu0 0.0
        %1124 = vmatprep.subr.mxu0 0.0
        %1125 = vmatpush1.msra.mxu0 0.0
        %1126 = vmatprep.subr.mxu0 0.0
        %1127 = vmatpush1.msra.mxu0 0.0
        %1128 = vmatprep.subr.mxu0 0.0
        %1129 = vmatpush1.msra.mxu0 0.0
        %1130 = vmatprep.subr.mxu0 0.0
        %1131 = vmatpush1.msra.mxu0 0.0
        %1132 = vmatprep.subr.mxu0 0.0
        %1133 = vmatpush1.msra.mxu0 0.0
        %1134 = vmatprep.subr.mxu0 0.0
        %1135 = vmatpush1.msra.mxu0 0.0
        %1136 = vmatprep.subr.mxu0 0.0
        %1137 = vmatpush1.msra.mxu0 0.0
        %1138 = vmatprep.subr.mxu0 0.0
        %1139 = vmatpush1.msra.mxu0 0.0
        %1140 = vmatprep.subr.mxu0 0.0
        %1141 = vmatpush1.msra.mxu0 0.0
        %1142 = vmatprep.subr.mxu0 0.0
        %1143 = vmatpush1.msra.mxu0 0.0
        %1144 = vmatprep.subr.mxu0 0.0
        %1145 = vmatpush1.msra.mxu0 0.0
        %1146 = vmatprep.subr.mxu0 0.0
        %1147 = vmatpush1.msra.mxu0 0.0
        %1148 = vmatprep.mubr.f32.mxu0 0.0
        %v1149 = vand.u32 %v928, 4294901760
        %1150 = vmatmul.mubr.f32.gmra.mrb[0].mxu0 %v1149
        %v1151 = vpop.f32.mrb[0].mxu0
        %v1152 = vadd.f32 %v1017, %v1151
        %v1153 = vpop.f32.mrb[0].mxu0
        %v1154 = vadd.f32 %v1019, %v1153
        %1155 = vmatprep.mubr.f32.mxu0 0.0
        %v1156 = vand.u32 %v931, 4294901760
        %1157 = vmatmul.mubr.f32.gmra.mrb[0].mxu0 %v1156
        %v1158 = vpop.f32.mrb[0].mxu0
        %v1159 = vadd.f32 %v1028, %v1158
        %v1160 = vpop.f32.mrb[0].mxu0
        %v1161 = vadd.f32 %v1030, %v1160
        %1162 = vmatprep.mubr.f32.mxu0 0.0
        %v1163 = vand.u32 %v934, 4294901760
        %1164 = vmatmul.mubr.f32.gmra.mrb[0].mxu0 %v1163
        %v1165 = vpop.f32.mrb[0].mxu0
        %v1166 = vadd.f32 %v1039, %v1165
        %v1167 = vpop.f32.mrb[0].mxu0
        %v1168 = vadd.f32 %v1041, %v1167
        %1169 = vmatprep.mubr.f32.mxu0 0.0
        %v1170 = vand.u32 %v937, 4294901760
        %1171 = vmatmul.mubr.f32.gmra.mrb[0].mxu0 %v1170
        %v1172 = vpop.f32.mrb[0].mxu0
        %v1173 = vadd.f32 %v1050, %v1172
        %v1174 = vpop.f32.mrb[0].mxu0
        %v1175 = vadd.f32 %v1052, %v1174
        %1176 = vdwg.mxu0
        %v1177 = vand.u32 %v262, 4294901760
        %v1178 = vsub.f32 %v262, %v1177
        %1179 = vmatprep.subr.mxu0 %v1178
        %v1180 = vand.u32 %v261, 4294901760
        %v1181 = vsub.f32 %v261, %v1180
        %1182 = vmatpush1.msra.mxu0 %v1181
        %v1183 = vand.u32 %v264, 4294901760
        %v1184 = vsub.f32 %v264, %v1183
        %1185 = vmatprep.subr.mxu0 %v1184
        %v1186 = vand.u32 %v263, 4294901760
        %v1187 = vsub.f32 %v263, %v1186
        %1188 = vmatpush1.msra.mxu0 %v1187
        %v1189 = vand.u32 %v266, 4294901760
        %v1190 = vsub.f32 %v266, %v1189
        %1191 = vmatprep.subr.mxu0 %v1190
        %v1192 = vand.u32 %v265, 4294901760
        %v1193 = vsub.f32 %v265, %v1192
        %1194 = vmatpush1.msra.mxu0 %v1193
        %1195 = vmatprep.subr.mxu0 0.0
        %1196 = vmatpush1.msra.mxu0 0.0
        %1197 = vmatprep.subr.mxu0 0.0
        %1198 = vmatpush1.msra.mxu0 0.0
        %1199 = vmatprep.subr.mxu0 0.0
        %1200 = vmatpush1.msra.mxu0 0.0
        %1201 = vmatprep.subr.mxu0 0.0
        %1202 = vmatpush1.msra.mxu0 0.0
        %1203 = vmatprep.subr.mxu0 0.0
        %1204 = vmatpush1.msra.mxu0 0.0
        %1205 = vmatprep.subr.mxu0 0.0
        %1206 = vmatpush1.msra.mxu0 0.0
        %1207 = vmatprep.subr.mxu0 0.0
        %1208 = vmatpush1.msra.mxu0 0.0
        %1209 = vmatprep.subr.mxu0 0.0
        %1210 = vmatpush1.msra.mxu0 0.0
        %1211 = vmatprep.subr.mxu0 0.0
        %1212 = vmatpush1.msra.mxu0 0.0
        %1213 = vmatprep.subr.mxu0 0.0
        %1214 = vmatpush1.msra.mxu0 0.0
        %1215 = vmatprep.subr.mxu0 0.0
        %1216 = vmatpush1.msra.mxu0 0.0
        %1217 = vmatprep.subr.mxu0 0.0
        %1218 = vmatpush1.msra.mxu0 0.0
        %1219 = vmatprep.subr.mxu0 0.0
        %1220 = vmatpush1.msra.mxu0 0.0
        %1221 = vmatprep.subr.mxu0 0.0
        %1222 = vmatpush1.msra.mxu0 0.0
        %1223 = vmatprep.subr.mxu0 0.0
        %1224 = vmatpush1.msra.mxu0 0.0
        %1225 = vmatprep.subr.mxu0 0.0
        %1226 = vmatpush1.msra.mxu0 0.0
        %1227 = vmatprep.subr.mxu0 0.0
        %1228 = vmatpush1.msra.mxu0 0.0
        %1229 = vmatprep.subr.mxu0 0.0
        %1230 = vmatpush1.msra.mxu0 0.0
        %1231 = vmatprep.subr.mxu0 0.0
        %1232 = vmatpush1.msra.mxu0 0.0
        %1233 = vmatprep.subr.mxu0 0.0
        %1234 = vmatpush1.msra.mxu0 0.0
        %1235 = vmatprep.subr.mxu0 0.0
        %1236 = vmatpush1.msra.mxu0 0.0
        %1237 = vmatprep.subr.mxu0 0.0
        %1238 = vmatpush1.msra.mxu0 0.0
        %1239 = vmatprep.subr.mxu0 0.0
        %1240 = vmatpush1.msra.mxu0 0.0
        %1241 = vmatprep.subr.mxu0 0.0
        %1242 = vmatpush1.msra.mxu0 0.0
        %1243 = vmatprep.subr.mxu0 0.0
        %1244 = vmatpush1.msra.mxu0 0.0
        %1245 = vmatprep.subr.mxu0 0.0
        %1246 = vmatpush1.msra.mxu0 0.0
        %1247 = vmatprep.subr.mxu0 0.0
        %1248 = vmatpush1.msra.mxu0 0.0
        %1249 = vmatprep.subr.mxu0 0.0
        %1250 = vmatpush1.msra.mxu0 0.0
        %1251 = vmatprep.subr.mxu0 0.0
        %1252 = vmatpush1.msra.mxu0 0.0
        %1253 = vmatprep.mubr.f32.mxu0 0.0
        %v1254 = vand.u32 %v928, 4294901760
        %v1255 = vsub.f32 %v928, %v1254
        %1256 = vmatmul.mubr.f32.gmra.mrb[0].mxu0 %v1255
        %v1257 = vpop.f32.mrb[0].mxu0
        %v1258 = vadd.f32 %v1152, %v1257
        %v1259 = vpop.f32.mrb[0].mxu0
        %v1260 = vadd.f32 %v1154, %v1259
        %1261 = vmatprep.mubr.f32.mxu0 0.0
        %v1262 = vand.u32 %v931, 4294901760
        %v1263 = vsub.f32 %v931, %v1262
        %1264 = vmatmul.mubr.f32.gmra.mrb[0].mxu0 %v1263
        %v1265 = vpop.f32.mrb[0].mxu0
        %v1266 = vadd.f32 %v1159, %v1265
        %v1267 = vpop.f32.mrb[0].mxu0
        %v1268 = vadd.f32 %v1161, %v1267
        %1269 = vmatprep.mubr.f32.mxu0 0.0
        %v1270 = vand.u32 %v934, 4294901760
        %v1271 = vsub.f32 %v934, %v1270
        %1272 = vmatmul.mubr.f32.gmra.mrb[0].mxu0 %v1271
        %v1273 = vpop.f32.mrb[0].mxu0
        %v1274 = vadd.f32 %v1166, %v1273
        %v1275 = vpop.f32.mrb[0].mxu0
        %v1276 = vadd.f32 %v1168, %v1275
        %1277 = vmatprep.mubr.f32.mxu0 0.0
        %v1278 = vand.u32 %v937, 4294901760
        %v1279 = vsub.f32 %v937, %v1278
        %1280 = vmatmul.mubr.f32.gmra.mrb[0].mxu0 %v1279
        %v1281 = vpop.f32.mrb[0].mxu0
        %v1282 = vadd.f32 %v1173, %v1281
        %v1283 = vpop.f32.mrb[0].mxu0
        %v1284 = vadd.f32 %v1175, %v1283
        %1285 = vdwg.mxu0
        %v1286 = vand.u32 %v262, 4294901760
        %1287 = vmatprep.subr.mxu0 %v1286
        %v1288 = vand.u32 %v261, 4294901760
        %1289 = vmatpush1.msra.mxu0 %v1288
        %v1290 = vand.u32 %v264, 4294901760
        %1291 = vmatprep.subr.mxu0 %v1290
        %v1292 = vand.u32 %v263, 4294901760
        %1293 = vmatpush1.msra.mxu0 %v1292
        %v1294 = vand.u32 %v266, 4294901760
        %1295 = vmatprep.subr.mxu0 %v1294
        %v1296 = vand.u32 %v265, 4294901760
        %1297 = vmatpush1.msra.mxu0 %v1296
        %1298 = vmatprep.subr.mxu0 0.0
        %1299 = vmatpush1.msra.mxu0 0.0
        %1300 = vmatprep.subr.mxu0 0.0
        %1301 = vmatpush1.msra.mxu0 0.0
        %1302 = vmatprep.subr.mxu0 0.0
        %1303 = vmatpush1.msra.mxu0 0.0
        %1304 = vmatprep.subr.mxu0 0.0
        %1305 = vmatpush1.msra.mxu0 0.0
        %1306 = vmatprep.subr.mxu0 0.0
        %1307 = vmatpush1.msra.mxu0 0.0
        %1308 = vmatprep.subr.mxu0 0.0
        %1309 = vmatpush1.msra.mxu0 0.0
        %1310 = vmatprep.subr.mxu0 0.0
        %1311 = vmatpush1.msra.mxu0 0.0
        %1312 = vmatprep.subr.mxu0 0.0
        %1313 = vmatpush1.msra.mxu0 0.0
        %1314 = vmatprep.subr.mxu0 0.0
        %1315 = vmatpush1.msra.mxu0 0.0
        %1316 = vmatprep.subr.mxu0 0.0
        %1317 = vmatpush1.msra.mxu0 0.0
        %1318 = vmatprep.subr.mxu0 0.0
        %1319 = vmatpush1.msra.mxu0 0.0
        %1320 = vmatprep.subr.mxu0 0.0
        %1321 = vmatpush1.msra.mxu0 0.0
        %1322 = vmatprep.subr.mxu0 0.0
        %1323 = vmatpush1.msra.mxu0 0.0
        %1324 = vmatprep.subr.mxu0 0.0
        %1325 = vmatpush1.msra.mxu0 0.0
        %1326 = vmatprep.subr.mxu0 0.0
        %1327 = vmatpush1.msra.mxu0 0.0
        %1328 = vmatprep.subr.mxu0 0.0
        %1329 = vmatpush1.msra.mxu0 0.0
        %1330 = vmatprep.subr.mxu0 0.0
        %1331 = vmatpush1.msra.mxu0 0.0
        %1332 = vmatprep.subr.mxu0 0.0
        %1333 = vmatpush1.msra.mxu0 0.0
        %1334 = vmatprep.subr.mxu0 0.0
        %1335 = vmatpush1.msra.mxu0 0.0
        %1336 = vmatprep.subr.mxu0 0.0
        %1337 = vmatpush1.msra.mxu0 0.0
        %1338 = vmatprep.subr.mxu0 0.0
        %1339 = vmatpush1.msra.mxu0 0.0
        %1340 = vmatprep.subr.mxu0 0.0
        %1341 = vmatpush1.msra.mxu0 0.0
        %1342 = vmatprep.subr.mxu0 0.0
        %1343 = vmatpush1.msra.mxu0 0.0
        %1344 = vmatprep.subr.mxu0 0.0
        %1345 = vmatpush1.msra.mxu0 0.0
        %1346 = vmatprep.subr.mxu0 0.0
        %1347 = vmatpush1.msra.mxu0 0.0
        %1348 = vmatprep.subr.mxu0 0.0
        %1349 = vmatpush1.msra.mxu0 0.0
        %1350 = vmatprep.subr.mxu0 0.0
        %1351 = vmatpush1.msra.mxu0 0.0
        %1352 = vmatprep.subr.mxu0 0.0
        %1353 = vmatpush1.msra.mxu0 0.0
        %1354 = vmatprep.subr.mxu0 0.0
        %1355 = vmatpush1.msra.mxu0 0.0
        %1356 = vmatprep.mubr.f32.mxu0 0.0
        %v1357 = vand.u32 %v928, 4294901760
        %v1358 = vsub.f32 %v928, %v1357
        %v1359 = vand.u32 %v1358, 4294901760
        %1360 = vmatmul.mubr.f32.gmra.mrb[0].mxu0 %v1359
        %v1361 = vpop.f32.mrb[0].mxu0
        %v1362 = vadd.f32 %v1258, %v1361
        %v1363 = vpop.f32.mrb[0].mxu0
        %v1364 = vadd.f32 %v1260, %v1363
        %1365 = vmatprep.mubr.f32.mxu0 0.0
        %v1366 = vand.u32 %v931, 4294901760
        %v1367 = vsub.f32 %v931, %v1366
        %v1368 = vand.u32 %v1367, 4294901760
        %1369 = vmatmul.mubr.f32.gmra.mrb[0].mxu0 %v1368
        %v1370 = vpop.f32.mrb[0].mxu0
        %v1371 = vadd.f32 %v1266, %v1370
        %v1372 = vpop.f32.mrb[0].mxu0
        %v1373 = vadd.f32 %v1268, %v1372
        %1374 = vmatprep.mubr.f32.mxu0 0.0
        %v1375 = vand.u32 %v934, 4294901760
        %v1376 = vsub.f32 %v934, %v1375
        %v1377 = vand.u32 %v1376, 4294901760
        %1378 = vmatmul.mubr.f32.gmra.mrb[0].mxu0 %v1377
        %v1379 = vpop.f32.mrb[0].mxu0
        %v1380 = vadd.f32 %v1274, %v1379
        %v1381 = vpop.f32.mrb[0].mxu0
        %v1382 = vadd.f32 %v1276, %v1381
        %1383 = vmatprep.mubr.f32.mxu0 0.0
        %v1384 = vand.u32 %v937, 4294901760
        %v1385 = vsub.f32 %v937, %v1384
        %v1386 = vand.u32 %v1385, 4294901760
        %1387 = vmatmul.mubr.f32.gmra.mrb[0].mxu0 %v1386
        %v1388 = vpop.f32.mrb[0].mxu0
        %v1389 = vadd.f32 %v1282, %v1388
        %v1390 = vpop.f32.mrb[0].mxu0
        %v1391 = vadd.f32 %v1284, %v1390
        %1392 = vdwg.mxu0
        %v1393 = vand.u32 %v262, 4294901760
        %v1394 = vsub.f32 %v262, %v1393
        %v1395 = vand.u32 %v1394, 4294901760
        %1396 = vmatprep.subr.mxu0 %v1395
        %v1397 = vand.u32 %v261, 4294901760
        %v1398 = vsub.f32 %v261, %v1397
        %v1399 = vand.u32 %v1398, 4294901760
        %1400 = vmatpush1.msra.mxu0 %v1399
        %v1401 = vand.u32 %v264, 4294901760
        %v1402 = vsub.f32 %v264, %v1401
        %v1403 = vand.u32 %v1402, 4294901760
        %1404 = vmatprep.subr.mxu0 %v1403
        %v1405 = vand.u32 %v263, 4294901760
        %v1406 = vsub.f32 %v263, %v1405
        %v1407 = vand.u32 %v1406, 4294901760
        %1408 = vmatpush1.msra.mxu0 %v1407
        %v1409 = vand.u32 %v266, 4294901760
        %v1410 = vsub.f32 %v266, %v1409
        %v1411 = vand.u32 %v1410, 4294901760
        %1412 = vmatprep.subr.mxu0 %v1411
        %v1413 = vand.u32 %v265, 4294901760
        %v1414 = vsub.f32 %v265, %v1413
        %v1415 = vand.u32 %v1414, 4294901760
        %1416 = vmatpush1.msra.mxu0 %v1415
        %1417 = vmatprep.subr.mxu0 0.0
        %1418 = vmatpush1.msra.mxu0 0.0
        %1419 = vmatprep.subr.mxu0 0.0
        %1420 = vmatpush1.msra.mxu0 0.0
        %1421 = vmatprep.subr.mxu0 0.0
        %1422 = vmatpush1.msra.mxu0 0.0
        %1423 = vmatprep.subr.mxu0 0.0
        %1424 = vmatpush1.msra.mxu0 0.0
        %1425 = vmatprep.subr.mxu0 0.0
        %1426 = vmatpush1.msra.mxu0 0.0
        %1427 = vmatprep.subr.mxu0 0.0
        %1428 = vmatpush1.msra.mxu0 0.0
        %1429 = vmatprep.subr.mxu0 0.0
        %1430 = vmatpush1.msra.mxu0 0.0
        %1431 = vmatprep.subr.mxu0 0.0
        %1432 = vmatpush1.msra.mxu0 0.0
        %1433 = vmatprep.subr.mxu0 0.0
        %1434 = vmatpush1.msra.mxu0 0.0
        %1435 = vmatprep.subr.mxu0 0.0
        %1436 = vmatpush1.msra.mxu0 0.0
        %1437 = vmatprep.subr.mxu0 0.0
        %1438 = vmatpush1.msra.mxu0 0.0
        %1439 = vmatprep.subr.mxu0 0.0
        %1440 = vmatpush1.msra.mxu0 0.0
        %1441 = vmatprep.subr.mxu0 0.0
        %1442 = vmatpush1.msra.mxu0 0.0
        %1443 = vmatprep.subr.mxu0 0.0
        %1444 = vmatpush1.msra.mxu0 0.0
        %1445 = vmatprep.subr.mxu0 0.0
        %1446 = vmatpush1.msra.mxu0 0.0
        %1447 = vmatprep.subr.mxu0 0.0
        %1448 = vmatpush1.msra.mxu0 0.0
        %1449 = vmatprep.subr.mxu0 0.0
        %1450 = vmatpush1.msra.mxu0 0.0
        %1451 = vmatprep.subr.mxu0 0.0
        %1452 = vmatpush1.msra.mxu0 0.0
        %1453 = vmatprep.subr.mxu0 0.0
        %1454 = vmatpush1.msra.mxu0 0.0
        %1455 = vmatprep.subr.mxu0 0.0
        %1456 = vmatpush1.msra.mxu0 0.0
        %1457 = vmatprep.subr.mxu0 0.0
        %1458 = vmatpush1.msra.mxu0 0.0
        %1459 = vmatprep.subr.mxu0 0.0
        %1460 = vmatpush1.msra.mxu0 0.0
        %1461 = vmatprep.subr.mxu0 0.0
        %1462 = vmatpush1.msra.mxu0 0.0
        %1463 = vmatprep.subr.mxu0 0.0
        %1464 = vmatpush1.msra.mxu0 0.0
        %1465 = vmatprep.subr.mxu0 0.0
        %1466 = vmatpush1.msra.mxu0 0.0
        %1467 = vmatprep.subr.mxu0 0.0
        %1468 = vmatpush1.msra.mxu0 0.0
        %1469 = vmatprep.subr.mxu0 0.0
        %1470 = vmatpush1.msra.mxu0 0.0
        %1471 = vmatprep.subr.mxu0 0.0
        %1472 = vmatpush1.msra.mxu0 0.0
        %1473 = vmatprep.subr.mxu0 0.0
        %1474 = vmatpush1.msra.mxu0 0.0
        %1475 = vmatprep.mubr.f32.mxu0 0.0
        %v1476 = vand.u32 %v928, 4294901760
        %1477 = vmatmul.mubr.f32.gmra.mrb[0].mxu0 %v1476
        %v1478 = vpop.f32.mrb[0].mxu0
        %v1479 = vadd.f32 %v1362, %v1478
        %v1480 = vpop.f32.mrb[0].mxu0
        %v1481 = vadd.f32 %v1364, %v1480
        %1482 = vmatprep.mubr.f32.mxu0 0.0
        %v1483 = vand.u32 %v931, 4294901760
        %1484 = vmatmul.mubr.f32.gmra.mrb[0].mxu0 %v1483
        %v1485 = vpop.f32.mrb[0].mxu0
        %v1486 = vadd.f32 %v1371, %v1485
        %v1487 = vpop.f32.mrb[0].mxu0
        %v1488 = vadd.f32 %v1373, %v1487
        %1489 = vmatprep.mubr.f32.mxu0 0.0
        %v1490 = vand.u32 %v934, 4294901760
        %1491 = vmatmul.mubr.f32.gmra.mrb[0].mxu0 %v1490
        %v1492 = vpop.f32.mrb[0].mxu0
        %v1493 = vadd.f32 %v1380, %v1492
        %v1494 = vpop.f32.mrb[0].mxu0
        %v1495 = vadd.f32 %v1382, %v1494
        %1496 = vmatprep.mubr.f32.mxu0 0.0
        %v1497 = vand.u32 %v937, 4294901760
        %1498 = vmatmul.mubr.f32.gmra.mrb[0].mxu0 %v1497
        %v1499 = vpop.f32.mrb[0].mxu0
        %v1500 = vadd.f32 %v1389, %v1499
        %v1501 = vpop.f32.mrb[0].mxu0
        %v1502 = vadd.f32 %v1391, %v1501
        %1503 = vdwg.mxu0
        %v1504 = vand.u32 %v262, 4294901760
        %1505 = vmatprep.subr.mxu0 %v1504
        %v1506 = vand.u32 %v261, 4294901760
        %1507 = vmatpush1.msra.mxu0 %v1506
        %v1508 = vand.u32 %v264, 4294901760
        %1509 = vmatprep.subr.mxu0 %v1508
        %v1510 = vand.u32 %v263, 4294901760
        %1511 = vmatpush1.msra.mxu0 %v1510
        %v1512 = vand.u32 %v266, 4294901760
        %1513 = vmatprep.subr.mxu0 %v1512
        %v1514 = vand.u32 %v265, 4294901760
        %1515 = vmatpush1.msra.mxu0 %v1514
        %1516 = vmatprep.subr.mxu0 0.0
        %1517 = vmatpush1.msra.mxu0 0.0
        %1518 = vmatprep.subr.mxu0 0.0
        %1519 = vmatpush1.msra.mxu0 0.0
        %1520 = vmatprep.subr.mxu0 0.0
        %1521 = vmatpush1.msra.mxu0 0.0
        %1522 = vmatprep.subr.mxu0 0.0
        %1523 = vmatpush1.msra.mxu0 0.0
        %1524 = vmatprep.subr.mxu0 0.0
        %1525 = vmatpush1.msra.mxu0 0.0
        %1526 = vmatprep.subr.mxu0 0.0
        %1527 = vmatpush1.msra.mxu0 0.0
        %1528 = vmatprep.subr.mxu0 0.0
        %1529 = vmatpush1.msra.mxu0 0.0
        %1530 = vmatprep.subr.mxu0 0.0
        %1531 = vmatpush1.msra.mxu0 0.0
        %1532 = vmatprep.subr.mxu0 0.0
        %1533 = vmatpush1.msra.mxu0 0.0
        %1534 = vmatprep.subr.mxu0 0.0
        %1535 = vmatpush1.msra.mxu0 0.0
        %1536 = vmatprep.subr.mxu0 0.0
        %1537 = vmatpush1.msra.mxu0 0.0
        %1538 = vmatprep.subr.mxu0 0.0
        %1539 = vmatpush1.msra.mxu0 0.0
        %1540 = vmatprep.subr.mxu0 0.0
        %1541 = vmatpush1.msra.mxu0 0.0
        %1542 = vmatprep.subr.mxu0 0.0
        %1543 = vmatpush1.msra.mxu0 0.0
        %1544 = vmatprep.subr.mxu0 0.0
        %1545 = vmatpush1.msra.mxu0 0.0
        %1546 = vmatprep.subr.mxu0 0.0
        %1547 = vmatpush1.msra.mxu0 0.0
        %1548 = vmatprep.subr.mxu0 0.0
        %1549 = vmatpush1.msra.mxu0 0.0
        %1550 = vmatprep.subr.mxu0 0.0
        %1551 = vmatpush1.msra.mxu0 0.0
        %1552 = vmatprep.subr.mxu0 0.0
        %1553 = vmatpush1.msra.mxu0 0.0
        %1554 = vmatprep.subr.mxu0 0.0
        %1555 = vmatpush1.msra.mxu0 0.0
        %1556 = vmatprep.subr.mxu0 0.0
        %1557 = vmatpush1.msra.mxu0 0.0
        %1558 = vmatprep.subr.mxu0 0.0
        %1559 = vmatpush1.msra.mxu0 0.0
        %1560 = vmatprep.subr.mxu0 0.0
        %1561 = vmatpush1.msra.mxu0 0.0
        %1562 = vmatprep.subr.mxu0 0.0
        %1563 = vmatpush1.msra.mxu0 0.0
        %1564 = vmatprep.subr.mxu0 0.0
        %1565 = vmatpush1.msra.mxu0 0.0
        %1566 = vmatprep.subr.mxu0 0.0
        %1567 = vmatpush1.msra.mxu0 0.0
        %1568 = vmatprep.subr.mxu0 0.0
        %1569 = vmatpush1.msra.mxu0 0.0
        %1570 = vmatprep.subr.mxu0 0.0
        %1571 = vmatpush1.msra.mxu0 0.0
        %1572 = vmatprep.subr.mxu0 0.0
        %1573 = vmatpush1.msra.mxu0 0.0
        %1574 = vmatprep.mubr.f32.mxu0 0.0
        %v1575 = vand.u32 %v928, 4294901760
        %1576 = vmatmul.mubr.f32.gmra.mrb[0].mxu0 %v1575
        %v1577 = vpop.f32.mrb[0].mxu0
        %v1578 = vadd.f32 %v1479, %v1577
        %v1579 = vpop.f32.mrb[0].mxu0
        %v1580 = vadd.f32 %v1481, %v1579
        %1581 = vmatprep.mubr.f32.mxu0 0.0
        %v1582 = vand.u32 %v931, 4294901760
        %1583 = vmatmul.mubr.f32.gmra.mrb[0].mxu0 %v1582
        %v1584 = vpop.f32.mrb[0].mxu0
        %v1585 = vadd.f32 %v1486, %v1584
        %v1586 = vpop.f32.mrb[0].mxu0
        %v1587 = vadd.f32 %v1488, %v1586
        %1588 = vmatprep.mubr.f32.mxu0 0.0
        %v1589 = vand.u32 %v934, 4294901760
        %1590 = vmatmul.mubr.f32.gmra.mrb[0].mxu0 %v1589
        %v1591 = vpop.f32.mrb[0].mxu0
        %v1592 = vadd.f32 %v1493, %v1591
        %v1593 = vpop.f32.mrb[0].mxu0
        %v1594 = vadd.f32 %v1495, %v1593
        %1595 = vmatprep.mubr.f32.mxu0 0.0
        %v1596 = vand.u32 %v937, 4294901760
        %1597 = vmatmul.mubr.f32.gmra.mrb[0].mxu0 %v1596
        %v1598 = vpop.f32.mrb[0].mxu0
        %v1599 = vadd.f32 %v1500, %v1598
        %v1600 = vpop.f32.mrb[0].mxu0
        %v1601 = vadd.f32 %v1502, %v1600
        %1602 = vdwg.mxu0
        %v1603 = vmul.f32 %v897, %v1578
        %v1604 = vmul.f32 %v899, %v1580
        %v1605 = vmul.f32 %v904, %v1585
        %v1606 = vmul.f32 %v906, %v1587
        %v1607 = vmul.f32 %v911, %v1592
        %v1608 = vmul.f32 %v913, %v1594
        %v1609 = vmul.f32 %v918, %v1599
        %v1610 = vmul.f32 %v920, %v1601
        %v1611 = vadd.f32 %v1603, %v1605
        %v1612 = vadd.f32 %v1611, %v1607
        %v1613 = vadd.f32 %v1612, %v1609
        %v1614 = vrot.slane %v1613, 4
        %v1615 = vadd.f32 %v1613, %v1614
        %v1616 = vrot.slane %v1615, 2
        %v1617 = vadd.f32 %v1615, %v1616
        %v1618 = vrot.slane %v1617, 1
        %v1619 = vadd.f32 %v1617, %v1618
        %v1620 = vadd.f32 %v1604, %v1606
        %v1621 = vadd.f32 %v1620, %v1608
        %v1622 = vadd.f32 %v1621, %v1610
        %v1623 = vrot.slane %v1622, 4
        %v1624 = vadd.f32 %v1622, %v1623
        %v1625 = vrot.slane %v1624, 2
        %v1626 = vadd.f32 %v1624, %v1625
        %v1627 = vrot.slane %v1626, 1
        %v1628 = vadd.f32 %v1626, %v1627
        %v1629 = vxor.u32 %v1619, 2147483648
        %v1630 = vxor.u32 %v1628, 2147483648
        %v1631 = vmul.f32 %v1629, 1.442695
        %v1632 = vpow.pop %v1631
        %v1633 = vmul.f32 %v1630, 1.442695
        %v1634 = vpow.pop %v1633
        %v1635 = vadd.f32 %v1632, 1.0
        %v1636 = vadd.f32 %v1634, 1.0
        %v1637 = vrcp.pop %v1635
        %v1638 = vmul.f32 1.0, %v1637
        %v1639 = vrcp.pop %v1636
        %v1640 = vmul.f32 1.0, %v1639
        %v1643 = vcombine.low %v1638, %v1640
        %v1645 = vunpack.c.l.s4 1966171168
        %v1646 = vunpack.c.0.s8 %v1645
        %v1647 = vlaneseq
        %v1648 = vshrl.u32 %v1647, 7
        %v1649 = vsub.s32 %v1646, %v1648
        %v1650 = vrot.slane %v1643, %v1649
        %v1652 = vunpack.c.l.s4 1966171168
        %v1653 = vunpack.c.0.s8 %v1652
        %v1654 = vlaneseq
        %v1655 = vshrl.u32 %v1654, 7
        %v1656 = vsub.s32 %v1653, %v1655
        %v1657 = vrot.slane %v1650, %v1656
        %v1659 = vlaneseq
        %vm1660 = vcmp.ge.s32.totalorder %v1659, 0
        %vm1661 = vcmp.lt.s32.totalorder %v1659, 256
        %vm1662 = vmand %vm1660, %vm1661
        %1663 = vst.msk [vmem:[%s203] sm:$0x3] %vm1662, %v1657
        %s1664 = sand.u32 %s120, 1
        %s1665 = scalar_lea.sflag [#allocation3], %s1664
        %s1666 = sand.u32 %s120, 1
        %s1667 = smul.addr %s1666, 2
        %s1668 = scalar_lea.vmem [#allocation2], %s1667
        // Predicated region
        $region37: #{wmf_forward.1} parent=35 // pred_check
          %p1669 = pneg %p130
        $region38: #{wmf_forward.1} parent=35 // pred_check_branch
          %1671 = sbr.rel (%p1669) target = $region40
        $region39: #{wmf_forward.1} parent=35 // pred_region
          %s1672 = smul.u32 2, %s18
          %s1674 = ssub.s32 32, 32
          %1675 = vsyncadd %s1665, %s1674
          %s1676 = smul.addr %s1672, 16
          %s1677 = scalar_lea.hbm %s4, %s1676
          %s1679 = sshll.u32 %s1668, 4
          %s1680 = int_to_ptr.vmem [resolvable:$true] %s1679
          %1682 = dma.vmem_to_hbm [thread:$0]  %s1680, 32, %s1677, %s1665
        $region40: #{wmf_forward.1} parent=35 // pred_fallthru
          _
      $region36: #{wmf_forward.1} parent=5 // pred_fallthru
        _
      %p1683 = scmp.le.s32.totalorder 2, %s13
      // Predicated region
      $region41: #{wmf_forward.1} parent=5 // pred_check
        %p1684 = pneg %p1683
      $region42: #{wmf_forward.1} parent=5 // pred_check_branch
        %1686 = sbr.rel (%p1684) target = $region44
      $region43: #{wmf_forward.1} parent=5 // pred_region
        %s1687 = ssub.s32 %s13, 2
        // Predicated region
        $region45: #{wmf_forward.1} parent=43 // pred_check
          %p1688 = pneg %p136
        $region46: #{wmf_forward.1} parent=43 // pred_check_branch
          %1690 = sbr.rel (%p1688) target = $region48
        $region47: #{wmf_forward.1} parent=43 // pred_region
          %s1691 = sand.u32 %s121, 1
          %s1692 = scalar_lea.sflag [#allocation3], %s1691
          %s1693 = sand.u32 %s121, 1
          %s1694 = smul.addr %s1693, 2
          %s1695 = scalar_lea.vmem [#allocation2], %s1694
          %1696 = dma.done %s1692, 32
        $region48: #{wmf_forward.1} parent=43 // pred_fallthru
          _
      $region44: #{wmf_forward.1} parent=5 // pred_fallthru
        _
    $region6: #{wmf_forward.1} parent=1 // loop_footer
      %s17 = sadd.s32 1, %s13
    $region7: #{wmf_forward.1} parent=1 // loop_footer_branch
      %12 = sbr.rel target = $region3
    $region8: #{wmf_forward.1} parent=1 // loop_exit
      _
    %1697 = vsyncpa [#allocation3], 1
    %s1698 = scalar_lea.sflag [#allocation3], 1
    %1699 = vsyncpa %s1698, 1

</llo_original>
